<compile_context>
chip_gen: v6e
topology: v6e:2x2x1
jax: 0.10.0
libtpu: 0.0.40
codegen_flags: <defaults>
</compile_context>

<pallas_src>
import jax
import jax.numpy as jnp
from jax.experimental import pallas as pl
from jax.experimental.pallas import tpu as pltpu


def _conv3x3_relu_kernel(x_ref, w_ref, b_ref, o_ref, xpad_ref, slab_ref):
    """One (batch element, Cout-tile) per grid step.

    x_ref   : (1, Cin, H, W)    input block, NCHW, compute dtype
    w_ref   : (TCo, 9*Cin)      weights, column = (ky*3 + kx)*Cin + ci
    b_ref   : (TCo, 1)          bias, f32
    o_ref   : (1, TCo, H*W)     output block, lane-dense last dim (NCHW-flat)
    xpad_ref: (Cin, H+2, W+2)   VMEM scratch: zero-padded image (persistent)
    slab_ref: (9*Cin, H*W)      VMEM scratch: im2col slab (persistent)
    """
    _, cin, H, W = x_ref.shape
    HW = H * W

    # The slab depends only on the batch element, not on the Cout tile.  The
    # Cout axis is the innermost grid axis and is marked "arbitrary", so
    # rebuilding only at c == 0 amortizes the im2col VPU/vst work over all
    # Cout tiles of this image and is core-safe under megacore sharding of n.
    @pl.when(pl.program_id(1) == 0)
    def _build_slab():
        # Zero only the 1-element halo border; the interior is fully
        # overwritten below (saves ~(H+2)*(W+2)*Cin stores per rebuild).
        xpad_ref[:, 0:1, :] = jnp.zeros((cin, 1, W + 2), xpad_ref.dtype)
        xpad_ref[:, H + 1:H + 2, :] = jnp.zeros((cin, 1, W + 2), xpad_ref.dtype)
        xpad_ref[:, :, 0:1] = jnp.zeros((cin, H + 2, 1), xpad_ref.dtype)
        xpad_ref[:, :, W + 1:W + 2] = jnp.zeros((cin, H + 2, 1), xpad_ref.dtype)
        xpad_ref[:, 1:H + 1, 1:W + 1] = x_ref[0]

        # im2col directly in (9*Cin, HW) orientation: lanes are HW-dense
        # regardless of Cin (no masked partial-lane stores for small Cin), and
        # the matmul below emits (TCo, HW) with no epilogue transpose.
        # (At W a multiple of 128 the (Cin,H,W)->(Cin,HW) collapse is
        # layout-preserving; at toy W it is a cheap in-VMEM relayout.)
        for ky in range(3):
            for kx in range(3):
                t = ky * 3 + kx
                slab_ref[t * cin:(t + 1) * cin, :] = (
                    xpad_ref[:, ky:ky + H, kx:kx + W].reshape(cin, HW))

    # Single fused MXU contraction, K = 9*Cin.  bf16 operands, f32 accumulate.
    # Result is already (TCo, HW): bias + ReLU and the store are lane-dense.
    acc = jnp.dot(w_ref[...], slab_ref[...],
                  preferred_element_type=jnp.float32)          # (TCo, HW)
    out = jnp.maximum(acc + b_ref[...], 0.0)
    o_ref[0] = out.astype(o_ref.dtype)


def double_conv_pallas(x_nchw, weight, bias, *, compute_dtype=jnp.bfloat16,
                       out_dtype=jnp.float32):
    """x_nchw: (N, Cin, H, W); weight: (Cout, Cin, 3, 3); bias: (Cout,).

    Returns out_dtype (N, Cout, H, W) = relu(conv2d(x, weight, 'same') + bias).
    """
    N, Cin, H, W = x_nchw.shape
    Cout = weight.shape[0]
    HW = H * W

    # NCHW consumed directly by the kernel: no wrapper-side transpose pass.
    x_c = x_nchw.astype(compute_dtype)
    # (Cout, Cin, 3, 3) -> (Cout, ky, kx, Cin) -> (Cout, 9*Cin); column index
    # = (ky*3 + kx)*Cin + ci, matching the slab row layout built in-kernel.
    w2 = jnp.transpose(weight, (0, 2, 3, 1)).reshape(Cout, 9 * Cin).astype(compute_dtype)
    b2 = bias.astype(jnp.float32).reshape(Cout, 1)

    # Cout tile: 256 fills the 256-wide v6e/v7x MXU; 128 otherwise (optimal on
    # v5e); whole Cout when it is not a multiple of 128 (toy shapes).
    if Cout % 256 == 0:
        block_cout = 256
    elif Cout % 128 == 0:
        block_cout = 128
    else:
        block_cout = Cout
    n_co = Cout // block_cout

    isz = jnp.dtype(compute_dtype).itemsize
    osz = jnp.dtype(out_dtype).itemsize
    # Requirement-driven VMEM limit: double-buffered blocks + persistent
    # scratch, +25% headroom, capped just under the chip's physical VMEM.
    req = (2 * Cin * H * W * isz                    # x block (double-buffered)
           + 2 * block_cout * 9 * Cin * isz         # weight block
           + 2 * block_cout * 4                     # bias block
           + 2 * block_cout * HW * osz              # out block
           + Cin * (H + 2) * (W + 2) * isz          # pad scratch
           + 9 * Cin * HW * isz)                    # im2col slab scratch
    try:
        vmem_cap = int(pltpu.get_tpu_info().vmem_capacity_bytes)
    except Exception:
        vmem_cap = 64 * 1024 * 1024                 # conservative (v7x) fallback
    vmem_limit = max(req + req // 4, 16 * 1024 * 1024)
    vmem_limit = int(min(vmem_limit, int(vmem_cap * 0.9)))

    cost = pl.CostEstimate(
        flops=2 * N * HW * 9 * Cin * Cout,
        transcendentals=0,
        bytes_accessed=(N * HW * Cin * isz + 9 * Cin * Cout * isz
                        + Cout * 4 + N * Cout * HW * osz))

    out_flat = pl.pallas_call(
        _conv3x3_relu_kernel,
        out_shape=jax.ShapeDtypeStruct((N, Cout, HW), out_dtype),
        grid_spec=pltpu.PrefetchScalarGridSpec(
            num_scalar_prefetch=0,
            grid=(N, n_co),
            in_specs=[
                pl.BlockSpec((1, Cin, H, W), lambda n, c: (n, 0, 0, 0)),
                pl.BlockSpec((block_cout, 9 * Cin), lambda n, c: (c, 0)),
                pl.BlockSpec((block_cout, 1), lambda n, c: (c, 0)),
            ],
            out_specs=pl.BlockSpec((1, block_cout, HW), lambda n, c: (n, c, 0)),
            scratch_shapes=[
                pltpu.VMEM((Cin, H + 2, W + 2), compute_dtype),
                pltpu.VMEM((9 * Cin, HW), compute_dtype),
            ],
        ),
        compiler_params=pltpu.CompilerParams(
            # Cout axis must be "arbitrary": the slab is built at c == 0 and
            # reused by later c steps, so megacore must not split that axis.
            dimension_semantics=("parallel", "arbitrary"),
            vmem_limit_bytes=vmem_limit),
        cost_estimate=cost,
    )(x_c, w2, b2)

    # Trailing-dim split only (free): the kernel already produced NCHW.
    return out_flat.reshape(N, Cout, H, W)


def _reference(x_nchw, weight, bias):
    """Pure-JAX reference matching nn.Conv2d(k=3, padding='same') + ReLU."""
    y = jax.lax.conv_general_dilated(
        x_nchw.astype(jnp.float32), weight.astype(jnp.float32),
        window_strides=(1, 1), padding="SAME",
        dimension_numbers=("NCHW", "OIHW", "NCHW"))
    return jnp.maximum(y + bias.reshape(1, -1, 1, 1), 0.0)


if __name__ == "__main__":
    key = jax.random.PRNGKey(0)
    N, Cin, H, W = 2, 4, 16, 16
    Cout = 8

    k_x, k_w, k_b = jax.random.split(key, 3)
    x = jax.random.normal(k_x, (N, Cin, H, W), dtype=jnp.float32)
    fan_in = Cin * 3 * 3
    bound = 1.0 / (fan_in ** 0.5)
    weight = jax.random.uniform(k_w, (Cout, Cin, 3, 3), jnp.float32, -bound, bound)
    bias = jax.random.uniform(k_b, (Cout,), jnp.float32, -bound, bound)

    out = jax.block_until_ready(double_conv_pallas(x, weight, bias))
    assert out.shape == (N, Cout, H, W), out.shape

    # Tight check: reference fed the same bf16-rounded operands (isolates
    # kernel bugs from the intentional bf16 feed; accumulation is f32 in both).
    x_q = x.astype(jnp.bfloat16).astype(jnp.float32)
    w_q = weight.astype(jnp.bfloat16).astype(jnp.float32)
    ref_q = _reference(x_q, w_q, bias)
    err_q = float(jnp.max(jnp.abs(out - ref_q)))
    assert jnp.allclose(out, ref_q, atol=1e-3, rtol=1e-3), err_q

    # Loose check against full-f32 PyTorch semantics (bf16 quantization noise).
    ref = _reference(x, weight, bias)
    err = float(jnp.max(jnp.abs(out - ref)))
    assert jnp.allclose(out, ref, atol=5e-2, rtol=5e-2), err

    print("KERNEL_OK")
</pallas_src>

<mosaic_0001>
module attributes {stable_mosaic.version = 11 : i64} {
  func.func @_conv3x3_relu_kernel(%arg0: i32, %arg1: i32, %arg2: memref<1x4x16x16xbf16, #tpu.memory_space<vmem>>, %arg3: memref<8x36xbf16, #tpu.memory_space<vmem>>, %arg4: memref<8x1xf32, #tpu.memory_space<vmem>>, %arg5: memref<1x8x256xf32, #tpu.memory_space<vmem>>, %arg6: memref<4x18x18xbf16, #tpu.memory_space<vmem>>, %arg7: memref<36x256xbf16, #tpu.memory_space<vmem>>) attributes {dimension_semantics = [#tpu.dimension_semantics<parallel>, #tpu.dimension_semantics<arbitrary>], iteration_bounds = array<i64: 2, 1>, scalar_prefetch = 0 : i64, scratch_operands = 2 : i64, tpu.core_type = #tpu.core_type<tc>, window_params = [{transform_indices = @transform_0, window_bounds = array<i64: 1, 4, 16, 16>}, {transform_indices = @transform_1, window_bounds = array<i64: 8, 36>}, {transform_indices = @transform_2, window_bounds = array<i64: 8, 1>}, {transform_indices = @transform_3, window_bounds = array<i64: 1, 8, 256>}]} {
    %c0_i32 = arith.constant 0 : i32
    %0 = arith.cmpi eq, %arg1, %c0_i32 : i32
    %1 = arith.extui %0 : i1 to i32
    %c0_i32_0 = arith.constant 0 : i32
    %2 = arith.cmpi ne, %1, %c0_i32_0 : i32
    scf.if %2 {
      %cst_10 = arith.constant 0.000000e+00 : bf16
      %14 = vector.broadcast %cst_10 : bf16 to vector<4x1x18xbf16>
      %c0_11 = arith.constant 0 : index
      %c0_12 = arith.constant 0 : index
      %c0_13 = arith.constant 0 : index
      %15 = vector.load %arg6[%c0_11, %c0_12, %c0_13] : memref<4x18x18xbf16, #tpu.memory_space<vmem>>, vector<4x1x18xbf16>
      tpu.vector_store %arg6[%c0_11, %c0_12, %c0_13], %14 {strides = array<i32>} : memref<4x18x18xbf16, #tpu.memory_space<vmem>>, vector<4x1x18xbf16>,
      %cst_14 = arith.constant 0.000000e+00 : bf16
      %16 = vector.broadcast %cst_14 : bf16 to vector<4x1x18xbf16>
      %c0_15 = arith.constant 0 : index
      %c17 = arith.constant 17 : index
      %c0_16 = arith.constant 0 : index
      %17 = vector.load %arg6[%c0_15, %c17, %c0_16] : memref<4x18x18xbf16, #tpu.memory_space<vmem>>, vector<4x1x18xbf16>
      tpu.vector_store %arg6[%c0_15, %c17, %c0_16], %16 {strides = array<i32>} : memref<4x18x18xbf16, #tpu.memory_space<vmem>>, vector<4x1x18xbf16>,
      %cst_17 = arith.constant 0.000000e+00 : bf16
      %18 = vector.broadcast %cst_17 : bf16 to vector<4x18x1xbf16>
      %c0_18 = arith.constant 0 : index
      %c0_19 = arith.constant 0 : index
      %c0_20 = arith.constant 0 : index
      %19 = vector.load %arg6[%c0_18, %c0_19, %c0_20] : memref<4x18x18xbf16, #tpu.memory_space<vmem>>, vector<4x18x1xbf16>
      tpu.vector_store %arg6[%c0_18, %c0_19, %c0_20], %18 {strides = array<i32>} : memref<4x18x18xbf16, #tpu.memory_space<vmem>>, vector<4x18x1xbf16>,
      %cst_21 = arith.constant 0.000000e+00 : bf16
      %20 = vector.broadcast %cst_21 : bf16 to vector<4x18x1xbf16>
      %c0_22 = arith.constant 0 : index
      %c0_23 = arith.constant 0 : index
      %c17_24 = arith.constant 17 : index
      %21 = vector.load %arg6[%c0_22, %c0_23, %c17_24] : memref<4x18x18xbf16, #tpu.memory_space<vmem>>, vector<4x18x1xbf16>
      tpu.vector_store %arg6[%c0_22, %c0_23, %c17_24], %20 {strides = array<i32>} : memref<4x18x18xbf16, #tpu.memory_space<vmem>>, vector<4x18x1xbf16>,
      %c0_25 = arith.constant 0 : index
      %c0_26 = arith.constant 0 : index
      %c0_27 = arith.constant 0 : index
      %c0_28 = arith.constant 0 : index
      %22 = vector.load %arg2[%c0_25, %c0_26, %c0_27, %c0_28] : memref<1x4x16x16xbf16, #tpu.memory_space<vmem>>, vector<1x4x16x16xbf16>
      %23 = vector.shape_cast %22 : vector<1x4x16x16xbf16> to vector<4x16x16xbf16>
      %c0_29 = arith.constant 0 : index
      %c1 = arith.constant 1 : index
      %c1_30 = arith.constant 1 : index
      %24 = vector.load %arg6[%c0_29, %c1, %c1_30] : memref<4x18x18xbf16, #tpu.memory_space<vmem>>, vector<4x16x16xbf16>
      tpu.vector_store %arg6[%c0_29, %c1, %c1_30], %23 {strides = array<i32>} : memref<4x18x18xbf16, #tpu.memory_space<vmem>>, vector<4x16x16xbf16>,
      %c0_31 = arith.constant 0 : index
      %c0_32 = arith.constant 0 : index
      %c0_33 = arith.constant 0 : index
      %25 = vector.load %arg6[%c0_31, %c0_32, %c0_33] : memref<4x18x18xbf16, #tpu.memory_space<vmem>>, vector<4x16x16xbf16>
      %26 = vector.shape_cast %25 : vector<4x16x16xbf16> to vector<4x256xbf16>
      %c0_34 = arith.constant 0 : index
      %c0_35 = arith.constant 0 : index
      %27 = vector.load %arg7[%c0_34, %c0_35] : memref<36x256xbf16, #tpu.memory_space<vmem>>, vector<4x256xbf16>
      tpu.vector_store %arg7[%c0_34, %c0_35], %26 {strides = array<i32>} : memref<36x256xbf16, #tpu.memory_space<vmem>>, vector<4x256xbf16>,
      %c0_36 = arith.constant 0 : index
      %c0_37 = arith.constant 0 : index
      %c1_38 = arith.constant 1 : index
      %28 = vector.load %arg6[%c0_36, %c0_37, %c1_38] : memref<4x18x18xbf16, #tpu.memory_space<vmem>>, vector<4x16x16xbf16>
      %29 = vector.shape_cast %28 : vector<4x16x16xbf16> to vector<4x256xbf16>
      %c4 = arith.constant 4 : index
      %c0_39 = arith.constant 0 : index
      %30 = vector.load %arg7[%c4, %c0_39] : memref<36x256xbf16, #tpu.memory_space<vmem>>, vector<4x256xbf16>
      tpu.vector_store %arg7[%c4, %c0_39], %29 {strides = array<i32>} : memref<36x256xbf16, #tpu.memory_space<vmem>>, vector<4x256xbf16>,
      %c0_40 = arith.constant 0 : index
      %c0_41 = arith.constant 0 : index
      %c2 = arith.constant 2 : index
      %31 = vector.load %arg6[%c0_40, %c0_41, %c2] : memref<4x18x18xbf16, #tpu.memory_space<vmem>>, vector<4x16x16xbf16>
      %32 = vector.shape_cast %31 : vector<4x16x16xbf16> to vector<4x256xbf16>
      %c8 = arith.constant 8 : index
      %c0_42 = arith.constant 0 : index
      %33 = vector.load %arg7[%c8, %c0_42] : memref<36x256xbf16, #tpu.memory_space<vmem>>, vector<4x256xbf16>
      tpu.vector_store %arg7[%c8, %c0_42], %32 {strides = array<i32>} : memref<36x256xbf16, #tpu.memory_space<vmem>>, vector<4x256xbf16>,
      %c0_43 = arith.constant 0 : index
      %c1_44 = arith.constant 1 : index
      %c0_45 = arith.constant 0 : index
      %34 = vector.load %arg6[%c0_43, %c1_44, %c0_45] : memref<4x18x18xbf16, #tpu.memory_space<vmem>>, vector<4x16x16xbf16>
      %35 = vector.shape_cast %34 : vector<4x16x16xbf16> to vector<4x256xbf16>
      %c12 = arith.constant 12 : index
      %c0_46 = arith.constant 0 : index
      %36 = vector.load %arg7[%c12, %c0_46] : memref<36x256xbf16, #tpu.memory_space<vmem>>, vector<4x256xbf16>
      tpu.vector_store %arg7[%c12, %c0_46], %35 {strides = array<i32>} : memref<36x256xbf16, #tpu.memory_space<vmem>>, vector<4x256xbf16>,
      %c0_47 = arith.constant 0 : index
      %c1_48 = arith.constant 1 : index
      %c1_49 = arith.constant 1 : index
      %37 = vector.load %arg6[%c0_47, %c1_48, %c1_49] : memref<4x18x18xbf16, #tpu.memory_space<vmem>>, vector<4x16x16xbf16>
      %38 = vector.shape_cast %37 : vector<4x16x16xbf16> to vector<4x256xbf16>
      %c16 = arith.constant 16 : index
      %c0_50 = arith.constant 0 : index
      %39 = vector.load %arg7[%c16, %c0_50] : memref<36x256xbf16, #tpu.memory_space<vmem>>, vector<4x256xbf16>
      tpu.vector_store %arg7[%c16, %c0_50], %38 {strides = array<i32>} : memref<36x256xbf16, #tpu.memory_space<vmem>>, vector<4x256xbf16>,
      %c0_51 = arith.constant 0 : index
      %c1_52 = arith.constant 1 : index
      %c2_53 = arith.constant 2 : index
      %40 = vector.load %arg6[%c0_51, %c1_52, %c2_53] : memref<4x18x18xbf16, #tpu.memory_space<vmem>>, vector<4x16x16xbf16>
      %41 = vector.shape_cast %40 : vector<4x16x16xbf16> to vector<4x256xbf16>
      %c20 = arith.constant 20 : index
      %c0_54 = arith.constant 0 : index
      %42 = vector.load %arg7[%c20, %c0_54] : memref<36x256xbf16, #tpu.memory_space<vmem>>, vector<4x256xbf16>
      tpu.vector_store %arg7[%c20, %c0_54], %41 {strides = array<i32>} : memref<36x256xbf16, #tpu.memory_space<vmem>>, vector<4x256xbf16>,
      %c0_55 = arith.constant 0 : index
      %c2_56 = arith.constant 2 : index
      %c0_57 = arith.constant 0 : index
      %43 = vector.load %arg6[%c0_55, %c2_56, %c0_57] : memref<4x18x18xbf16, #tpu.memory_space<vmem>>, vector<4x16x16xbf16>
      %44 = vector.shape_cast %43 : vector<4x16x16xbf16> to vector<4x256xbf16>
      %c24 = arith.constant 24 : index
      %c0_58 = arith.constant 0 : index
      %45 = vector.load %arg7[%c24, %c0_58] : memref<36x256xbf16, #tpu.memory_space<vmem>>, vector<4x256xbf16>
      tpu.vector_store %arg7[%c24, %c0_58], %44 {strides = array<i32>} : memref<36x256xbf16, #tpu.memory_space<vmem>>, vector<4x256xbf16>,
      %c0_59 = arith.constant 0 : index
      %c2_60 = arith.constant 2 : index
      %c1_61 = arith.constant 1 : index
      %46 = vector.load %arg6[%c0_59, %c2_60, %c1_61] : memref<4x18x18xbf16, #tpu.memory_space<vmem>>, vector<4x16x16xbf16>
      %47 = vector.shape_cast %46 : vector<4x16x16xbf16> to vector<4x256xbf16>
      %c28 = arith.constant 28 : index
      %c0_62 = arith.constant 0 : index
      %48 = vector.load %arg7[%c28, %c0_62] : memref<36x256xbf16, #tpu.memory_space<vmem>>, vector<4x256xbf16>
      tpu.vector_store %arg7[%c28, %c0_62], %47 {strides = array<i32>} : memref<36x256xbf16, #tpu.memory_space<vmem>>, vector<4x256xbf16>,
      %c0_63 = arith.constant 0 : index
      %c2_64 = arith.constant 2 : index
      %c2_65 = arith.constant 2 : index
      %49 = vector.load %arg6[%c0_63, %c2_64, %c2_65] : memref<4x18x18xbf16, #tpu.memory_space<vmem>>, vector<4x16x16xbf16>
      %50 = vector.shape_cast %49 : vector<4x16x16xbf16> to vector<4x256xbf16>
      %c32 = arith.constant 32 : index
      %c0_66 = arith.constant 0 : index
      %51 = vector.load %arg7[%c32, %c0_66] : memref<36x256xbf16, #tpu.memory_space<vmem>>, vector<4x256xbf16>
      tpu.vector_store %arg7[%c32, %c0_66], %50 {strides = array<i32>} : memref<36x256xbf16, #tpu.memory_space<vmem>>, vector<4x256xbf16>,
    } else {
    }
    %c0 = arith.constant 0 : index
    %c0_1 = arith.constant 0 : index
    %3 = vector.load %arg3[%c0, %c0_1] : memref<8x36xbf16, #tpu.memory_space<vmem>>, vector<8x36xbf16>
    %c0_2 = arith.constant 0 : index
    %c0_3 = arith.constant 0 : index
    %4 = vector.load %arg7[%c0_2, %c0_3] : memref<36x256xbf16, #tpu.memory_space<vmem>>, vector<36x256xbf16>
    %cst = arith.constant dense<0.000000e+00> : vector<8x256xf32>
    %5 = tpu.matmul %3, %4, %cst {dimension_numbers = #tpu.dot_dimension_numbers<[1], [0], [0], [1], [0, 0, 1, 1], [], []>} : vector<8x36xbf16>, vector<36x256xbf16>, vector<8x256xf32> -> vector<8x256xf32>
    %c0_4 = arith.constant 0 : index
    %c0_5 = arith.constant 0 : index
    %6 = vector.load %arg4[%c0_4, %c0_5] : memref<8x1xf32, #tpu.memory_space<vmem>>, vector<8x1xf32>
    %7 = vector.broadcast %6 : vector<8x1xf32> to vector<8x256xf32>
    %8 = arith.addf %5, %7 : vector<8x256xf32>
    %cst_6 = arith.constant 0.000000e+00 : f32
    %9 = vector.broadcast %cst_6 : f32 to vector<8x256xf32>
    %10 = arith.maximumf %8, %9 : vector<8x256xf32>
    %c0_7 = arith.constant 0 : index
    %c0_8 = arith.constant 0 : index
    %c0_9 = arith.constant 0 : index
    %11 = vector.load %arg5[%c0_7, %c0_8, %c0_9] : memref<1x8x256xf32, #tpu.memory_space<vmem>>, vector<1x8x256xf32>
    %12 = vector.shape_cast %11 : vector<1x8x256xf32> to vector<8x256xf32>
    %13 = vector.shape_cast %10 : vector<8x256xf32> to vector<1x8x256xf32>
    tpu.vector_store %arg5[%c0_7, %c0_8, %c0_9], %13 {strides = array<i32>} : memref<1x8x256xf32, #tpu.memory_space<vmem>>, vector<1x8x256xf32>,
    return
  }
  func.func @transform_0(%arg0: i32, %arg1: i32) -> (i32, i32, i32, i32) {
    %c0_i32 = arith.constant 0 : i32
    %c0_i32_0 = arith.constant 0 : i32
    %c0_i32_1 = arith.constant 0 : i32
    %c0_i32_2 = arith.constant 0 : i32
    return %arg0, %c0_i32, %c0_i32_0, %c0_i32_1 : i32, i32, i32, i32
  }
  func.func @transform_1(%arg0: i32, %arg1: i32) -> (i32, i32) {
    %c0_i32 = arith.constant 0 : i32
    %c0_i32_0 = arith.constant 0 : i32
    return %arg1, %c0_i32 : i32, i32
  }
  func.func @transform_2(%arg0: i32, %arg1: i32) -> (i32, i32) {
    %c0_i32 = arith.constant 0 : i32
    %c0_i32_0 = arith.constant 0 : i32
    return %arg1, %c0_i32 : i32, i32
  }
  func.func @transform_3(%arg0: i32, %arg1: i32) -> (i32, i32, i32) {
    %c0_i32 = arith.constant 0 : i32
    %c0_i32_0 = arith.constant 0 : i32
    return %arg0, %arg1, %c0_i32 : i32, i32, i32
  }
}

</mosaic_0001>

<llo_original>
// kernel: tpu_custom_call.1
$region0: #{tpu_custom_call.1}
  #allocation0 [shape = 'u32[]', space=smem, size = 0x4, offset = 0x4, fixed_abs, tag = 'smem constant byte address 0x4 - core index']
  #allocation1 [shape = 'u32[144,128]{1,0:T(1,128)}', space=vmem, size = 0x12000, scoped, tag = 'internal scratch']
  #allocation2 [shape = 'bf16[4,18,18]{2,1,0:T(8,128)(2,1)}', space=vmem, size = 0x6000, scoped, tag = 'scratch operand']
  #allocation3 [shape = 'bf16[36,256]{1,0:T(8,128)(2,1)}', space=vmem, size = 0x5000, scoped, tag = 'scratch operand']
  %s0 = inlined_call_operand.hbm [shape: bf16[2,4,16,16], index: 0, kind: input, shape index: {}]
  %s1 = inlined_call_operand.vmem [shape: bf16[8,36], index: 1, kind: input, shape index: {}]
  %s2 = inlined_call_operand.vmem [shape: f32[8,1], index: 2, kind: input, shape index: {}]
  %s3 = inlined_call_operand.hbm [shape: f32[2,8,256], index: 3, kind: output, shape index: {}]
  %s4 = sld [smem:[#allocation0]]
  $region53: #{tpu_custom_call.1} parent=0
    _
  %s6 = ssub.s32 1, %s4
  %s7 = scalar_select 0, %s6, %s4
  $region1: #{tpu_custom_call.1} parent=0
    #allocation4 [shape = 'u8[32768]{0}', space=vmem, size = 0x8000, scoped, tag = 'input window, operand 0']
    #allocation5 [shape = 's32[2]{0}', space=sflag, size = 0x8, scoped, tag = 'scoped memory for tpu_custom_call.1']
    #allocation6 [shape = 's32[2]{0}', space=sflag, size = 0x8, scoped, tag = 'scoped memory for tpu_custom_call.1']
    #allocation7 [shape = 'u8[16384]{0}', space=vmem, size = 0x4000, scoped, tag = 'output window, operand 0']
    %8 = vsyncpa [#allocation5], 0
    %s9 = scalar_lea.sflag [#allocation5], 1
    %10 = vsyncpa %s9, 0
    %11 = vsyncpa [#allocation6], 0
    %s12 = scalar_lea.sflag [#allocation6], 1
    %13 = vsyncpa %s12, 0
    loop: start=0, step=1, limit=4
    $region2: #{tpu_custom_call.1} parent=1 // loop_pre_header
      _
    $region3: #{tpu_custom_call.1} parent=1 // loop_header
      %s15 = sphi 0, %s19
      %p16 = scmp.ge.s32.totalorder %s15, 4
      %s22 = sphi 0, %s34
      %s23 = sphi 0, %s30
      %s24 = sphi 0, %s22
      %s25 = sphi 0, %s23
      %s26 = sphi 0, %s24
      %s27 = sphi 0, %s25
      %s37 = sphi 0, %s39
      %s40 = sphi 0, %s37
      %s41 = sphi 0, %s40
      %s57 = sphi 0, %s41
      %s63 = sphi 0, %s65
      %s66 = sphi 0, %s63
      %s67 = sphi 0, %s66
      %s83 = sphi 0, %s67
      %s89 = sphi 0, %s91
      %s92 = sphi 0, %s89
      %s93 = sphi 0, %s92
      %s109 = sphi 0, %s93
      %s117 = sphi 0, %s119
      %s120 = sphi 0, %s117
      %s121 = sphi 0, %s120
      %s137 = sphi 0, %s121
    $region4: #{tpu_custom_call.1} parent=1 // loop_header_branch
      %18 = sbr.rel (%p16) target = $region8
    $region5: #{tpu_custom_call.1} parent=1 // loop_body
      %s20 = ssub.s32 %s15, 1
      %s21 = ssub.s32 %s15, 2
      %s28 = sadd.s32 1, %s23
      %p29 = scmp.ge.s32.totalorder %s28, 1
      %s30 = scalar_select %p29, 0, %s28
      %s31 = sadd.s32 1, %s22
      %s32 = scalar_select %p29, %s31, %s22
      %p33 = scmp.ge.s32.totalorder %s32, 2
      %s34 = scalar_select %p33, 0, %s32
      %s35 = ssub.s32 %s22, %s34
      %p36 = scmp.eq.s32.totalorder %s35, 0
      %s38 = sadd.s32 %s37, 1
      %s39 = scalar_select %p36, %s37, %s38
      %p42 = pneg %p36
      %p43 = scmp.eq.s32.totalorder %s15, 1
      %p44 = por %p42, %p43
      %p45 = scmp.ne.s32.totalorder %s37, %s40
      %p46 = scmp.eq.s32.totalorder %s15, 0
      %p47 = por %p45, %p46
      %p48 = scmp.ne.s32.totalorder %s37, %s40
      %p49 = scmp.eq.s32.totalorder %s20, 1
      %p50 = por %p48, %p49
      %p51 = scmp.ne.s32.totalorder %s40, %s41
      %p52 = scmp.eq.s32.totalorder %s20, 0
      %p53 = por %p51, %p52
      %p54 = scmp.ne.s32.totalorder %s40, %s41
      %p55 = scmp.eq.s32.totalorder %s21, 1
      %p56 = por %p54, %p55
      %p58 = scmp.ne.s32.totalorder %s41, %s57
      %p59 = scmp.eq.s32.totalorder %s21, 0
      %p60 = por %p58, %p59
      %s61 = ssub.s32 %s23, %s30
      %p62 = scmp.eq.s32.totalorder %s61, 0
      %s64 = sadd.s32 %s63, 1
      %s65 = scalar_select %p62, %s63, %s64
      %p68 = pneg %p62
      %p69 = scmp.eq.s32.totalorder %s15, 1
      %p70 = por %p68, %p69
      %p71 = scmp.ne.s32.totalorder %s63, %s66
      %p72 = scmp.eq.s32.totalorder %s15, 0
      %p73 = por %p71, %p72
      %p74 = scmp.ne.s32.totalorder %s63, %s66
      %p75 = scmp.eq.s32.totalorder %s20, 1
      %p76 = por %p74, %p75
      %p77 = scmp.ne.s32.totalorder %s66, %s67
      %p78 = scmp.eq.s32.totalorder %s20, 0
      %p79 = por %p77, %p78
      %p80 = scmp.ne.s32.totalorder %s66, %s67
      %p81 = scmp.eq.s32.totalorder %s21, 1
      %p82 = por %p80, %p81
      %p84 = scmp.ne.s32.totalorder %s67, %s83
      %p85 = scmp.eq.s32.totalorder %s21, 0
      %p86 = por %p84, %p85
      %s87 = ssub.s32 %s23, %s30
      %p88 = scmp.eq.s32.totalorder %s87, 0
      %s90 = sadd.s32 %s89, 1
      %s91 = scalar_select %p88, %s89, %s90
      %p94 = pneg %p88
      %p95 = scmp.eq.s32.totalorder %s15, 1
      %p96 = por %p94, %p95
      %p97 = scmp.ne.s32.totalorder %s89, %s92
      %p98 = scmp.eq.s32.totalorder %s15, 0
      %p99 = por %p97, %p98
      %p100 = scmp.ne.s32.totalorder %s89, %s92
      %p101 = scmp.eq.s32.totalorder %s20, 1
      %p102 = por %p100, %p101
      %p103 = scmp.ne.s32.totalorder %s92, %s93
      %p104 = scmp.eq.s32.totalorder %s20, 0
      %p105 = por %p103, %p104
      %p106 = scmp.ne.s32.totalorder %s92, %s93
      %p107 = scmp.eq.s32.totalorder %s21, 1
      %p108 = por %p106, %p107
      %p110 = scmp.ne.s32.totalorder %s93, %s109
      %p111 = scmp.eq.s32.totalorder %s21, 0
      %p112 = por %p110, %p111
      %s113 = ssub.s32 %s22, %s34
      %s114 = ssub.s32 %s23, %s30
      %s115 = sor.u32 %s113, %s114
      %p116 = scmp.eq.s32.totalorder %s115, 0
      %s118 = sadd.s32 %s117, 1
      %s119 = scalar_select %p116, %s117, %s118
      %p122 = pneg %p116
      %p123 = scmp.eq.s32.totalorder %s15, 1
      %p124 = por %p122, %p123
      %p125 = scmp.ne.s32.totalorder %s117, %s120
      %p126 = scmp.eq.s32.totalorder %s15, 0
      %p127 = por %p125, %p126
      %p128 = scmp.ne.s32.totalorder %s117, %s120
      %p129 = scmp.eq.s32.totalorder %s20, 1
      %p130 = por %p128, %p129
      %p131 = scmp.ne.s32.totalorder %s120, %s121
      %p132 = scmp.eq.s32.totalorder %s20, 0
      %p133 = por %p131, %p132
      %p134 = scmp.ne.s32.totalorder %s120, %s121
      %p135 = scmp.eq.s32.totalorder %s21, 1
      %p136 = por %p134, %p135
      %p138 = scmp.ne.s32.totalorder %s121, %s137
      %p139 = scmp.eq.s32.totalorder %s21, 0
      %p140 = por %p138, %p139
      %p141 = scmp.le.s32.totalorder 1, %s15
      %p142 = scmp.lt.s32.totalorder %s15, 3
      %p143 = pnand %p141, %p142
      %p144 = pneg %p143
      // Predicated region
      $region9: #{tpu_custom_call.1} parent=5 // pred_check
        _
      $region10: #{tpu_custom_call.1} parent=5 // pred_check_branch
        %146 = sbr.rel (%p143) target = $region12
      $region11: #{tpu_custom_call.1} parent=5 // pred_region
        %s147 = ssub.s32 %s15, 1
        // Predicated region
        $region13: #{tpu_custom_call.1} parent=11 // pred_check
          %p148 = pneg %p79
        $region14: #{tpu_custom_call.1} parent=11 // pred_check_branch
          %150 = sbr.rel (%p148) target = $region16
        $region15: #{tpu_custom_call.1} parent=11 // pred_region
          %p151 = scmp.lt.s32.totalorder %s25, 0
          %s152 = scalar_select %p151, %s25, 0
          %s153 = smul.addr %s152, 4
          %s154 = scalar_lea.vmem %s1, %s153
        $region16: #{tpu_custom_call.1} parent=11 // pred_fallthru
          _
        // Predicated region
        $region17: #{tpu_custom_call.1} parent=11 // pred_check
          %p155 = pneg %p105
        $region18: #{tpu_custom_call.1} parent=11 // pred_check_branch
          %157 = sbr.rel (%p155) target = $region20
        $region19: #{tpu_custom_call.1} parent=11 // pred_region
          %p158 = scmp.lt.s32.totalorder %s25, 0
          %s159 = scalar_select %p158, %s25, 0
          %s160 = smul.addr %s159, 8
          %s161 = scalar_lea.vmem %s2, %s160
        $region20: #{tpu_custom_call.1} parent=11 // pred_fallthru
          _
      $region12: #{tpu_custom_call.1} parent=5 // pred_fallthru
        _
      %p162 = scmp.lt.s32.totalorder %s15, 2
      // Predicated region
      $region21: #{tpu_custom_call.1} parent=5 // pred_check
        %p163 = pneg %p162
      $region22: #{tpu_custom_call.1} parent=5 // pred_check_branch
        %165 = sbr.rel (%p163) target = $region24
      $region23: #{tpu_custom_call.1} parent=5 // pred_region
        // Predicated region
        $region25: #{tpu_custom_call.1} parent=23 // pred_check
          %p166 = pneg %p47
        $region26: #{tpu_custom_call.1} parent=23 // pred_check_branch
          %168 = sbr.rel (%p166) target = $region28
        $region27: #{tpu_custom_call.1} parent=23 // pred_region
          %s169 = sand.u32 %s37, 1
          %s170 = scalar_lea.sflag [#allocation5], %s169
          %s171 = sand.u32 %s37, 1
          %s172 = smul.addr %s171, 32
          %s173 = scalar_lea.vmem [#allocation4], %s172
          %s175 = ssub.s32 512, 512
          %176 = vsyncadd %s170, %s175
          %s177 = smul.addr %s22, 8
          %s178 = smul.addr %s177, 64
          %s179 = scalar_lea.hbm %s0, %s178
          %s180 = sshll.u32 %s173, 4
          %s181 = int_to_ptr.vmem [resolvable:$true] %s180
          %186 = dma.hbm_to_vmem [thread:$0]  %s179, 512, %s181, %s170, 64, 64, 4
        $region28: #{tpu_custom_call.1} parent=23 // pred_fallthru
          _
      $region24: #{tpu_custom_call.1} parent=5 // pred_fallthru
        _
      %p187 = scmp.le.s32.totalorder 1, %s15
      %p188 = scmp.lt.s32.totalorder %s15, 3
      %p189 = pnand %p187, %p188
      %p190 = pneg %p189
      // Predicated region
      $region29: #{tpu_custom_call.1} parent=5 // pred_check
        _
      $region30: #{tpu_custom_call.1} parent=5 // pred_check_branch
        %192 = sbr.rel (%p189) target = $region32
      $region31: #{tpu_custom_call.1} parent=5 // pred_region
        %s193 = ssub.s32 %s15, 1
        %s194 = sand.u32 %s40, 1
        %s195 = scalar_lea.sflag [#allocation5], %s194
        %s196 = sand.u32 %s40, 1
        %s197 = smul.addr %s196, 32
        %s198 = scalar_lea.vmem [#allocation4], %s197
        // Predicated region
        $region33: #{tpu_custom_call.1} parent=31 // pred_check
          %p199 = pneg %p53
        $region34: #{tpu_custom_call.1} parent=31 // pred_check_branch
          %201 = sbr.rel (%p199) target = $region36
        $region35: #{tpu_custom_call.1} parent=31 // pred_region
          %202 = dma.done %s195, 512
        $region36: #{tpu_custom_call.1} parent=31 // pred_fallthru
          _
        %s203 = sand.u32 %s40, 1
        %s204 = scalar_lea.sflag [#allocation5], %s203
        %s205 = sand.u32 %s40, 1
        %s206 = smul.addr %s205, 32
        %s207 = scalar_lea.vmem [#allocation4], %s206
        %p208 = pneg %p53
        %p209 = pneg %p50
        %p210 = scmp.lt.s32.totalorder %s25, 0
        %s211 = scalar_select %p210, %s25, 0
        %s212 = smul.addr %s211, 4
        %s213 = scalar_lea.vmem %s1, %s212
        %p214 = pneg %p79
        %p215 = pneg %p76
        %p216 = scmp.lt.s32.totalorder %s25, 0
        %s217 = scalar_select %p216, %s25, 0
        %s218 = smul.addr %s217, 8
        %s219 = scalar_lea.vmem %s2, %s218
        %p220 = pneg %p105
        %p221 = pneg %p102
        %p222 = pneg %p133
        %p223 = pneg %p130
        %s224 = sand.u32 %s120, 1
        %s225 = scalar_lea.sflag [#allocation6], %s224
        %s226 = sand.u32 %s120, 1
        %s227 = smul.addr %s226, 16
        %s228 = scalar_lea.vmem [#allocation7], %s227
        %p229 = scmp.lt.s32.totalorder %s25, 0
        %s230 = scalar_select %p229, %s25, 0
        %s231 = smul.addr %s230, 4
        %s232 = scalar_lea.vmem %s1, %s231
        %p233 = scmp.lt.s32.totalorder %s25, 0
        %s234 = scalar_select %p233, %s25, 0
        %s235 = smul.addr %s234, 8
        %s236 = scalar_lea.vmem %s2, %s235
        %p238 = scmp.eq.s32.totalorder %s25, 0
        // Predicated region
        $region37: #{tpu_custom_call.1} parent=31 // pred_check
          %p239 = pneg %p238
        $region38: #{tpu_custom_call.1} parent=31 // pred_check_branch
          %241 = sbr.rel (%p239) target = $region40
        $region39: #{tpu_custom_call.1} parent=31 // pred_region
          %vm242 = vcmask 139264
          %vm243 = vsmask.f32 256
          %vm244 = vmand %vm242, %vm243
          %v245 = vld [vmem:[#allocation2] sm:$0x1]
          %v246 = vsel %vm244, 0, %v245
          %247 = vst [vmem:[#allocation2] sm:$0x1] %v246
          %v248 = vld [vmem:[#allocation2 + $0xc] sm:$0x1]
          %v249 = vsel %vm244, 0, %v248
          %250 = vst [vmem:[#allocation2 + $0xc] sm:$0x1] %v249
          %v251 = vld [vmem:[#allocation2 + $0x18] sm:$0x1]
          %v252 = vsel %vm244, 0, %v251
          %253 = vst [vmem:[#allocation2 + $0x18] sm:$0x1] %v252
          %v254 = vld [vmem:[#allocation2 + $0x24] sm:$0x1]
          %v255 = vsel %vm244, 0, %v254
          %256 = vst [vmem:[#allocation2 + $0x24] sm:$0x1] %v255
          %vm257 = vsmask.f32 7938
          %vm258 = vmand %vm242, %vm257
          %v259 = vld [vmem:[#allocation2 + $0x8] sm:$0x1]
          %v260 = vsel %vm258, 0, %v259
          %261 = vst [vmem:[#allocation2 + $0x8] sm:$0x1] %v260
          %v262 = vld [vmem:[#allocation2 + $0x14] sm:$0x1]
          %v263 = vsel %vm258, 0, %v262
          %264 = vst [vmem:[#allocation2 + $0x14] sm:$0x1] %v263
          %v265 = vld [vmem:[#allocation2 + $0x20] sm:$0x1]
          %v266 = vsel %vm258, 0, %v265
          %267 = vst [vmem:[#allocation2 + $0x20] sm:$0x1] %v266
          %v268 = vld [vmem:[#allocation2 + $0x2c] sm:$0x1]
          %v269 = vsel %vm258, 0, %v268
          %270 = vst [vmem:[#allocation2 + $0x2c] sm:$0x1] %v269
          %vm271 = vcmask 3072
          %272 = vst.msk [vmem:[#allocation2] sm:$0xf] %vm271, 0
          %273 = vst.msk [vmem:[#allocation2 + $0x4] sm:$0xf] %vm271, 0
          %vm274 = vcmask 0
          %275 = vst.msk [vmem:[#allocation2 + $0x8] sm:$0x1] %vm274, 0
          %276 = vst.msk [vmem:[#allocation2 + $0xc] sm:$0xf] %vm271, 0
          %277 = vst.msk [vmem:[#allocation2 + $0x10] sm:$0xf] %vm271, 0
          %278 = vst.msk [vmem:[#allocation2 + $0x14] sm:$0x1] %vm274, 0
          %279 = vst.msk [vmem:[#allocation2 + $0x18] sm:$0xf] %vm271, 0
          %280 = vst.msk [vmem:[#allocation2 + $0x1c] sm:$0xf] %vm271, 0
          %281 = vst.msk [vmem:[#allocation2 + $0x20] sm:$0x1] %vm274, 0
          %282 = vst.msk [vmem:[#allocation2 + $0x24] sm:$0xf] %vm271, 0
          %283 = vst.msk [vmem:[#allocation2 + $0x28] sm:$0xf] %vm271, 0
          %284 = vst.msk [vmem:[#allocation2 + $0x2c] sm:$0x1] %vm274, 0
          %vm285 = vcmask 142472
          %286 = vst.msk [vmem:[#allocation2] sm:$0xf] %vm285, 0
          %287 = vst.msk [vmem:[#allocation2 + $0x4] sm:$0xf] %vm285, 0
          %vm288 = vcmask 139400
          %289 = vst.msk [vmem:[#allocation2 + $0x8] sm:$0x1] %vm288, 0
          %290 = vst.msk [vmem:[#allocation2 + $0xc] sm:$0xf] %vm285, 0
          %291 = vst.msk [vmem:[#allocation2 + $0x10] sm:$0xf] %vm285, 0
          %292 = vst.msk [vmem:[#allocation2 + $0x14] sm:$0x1] %vm288, 0
          %293 = vst.msk [vmem:[#allocation2 + $0x18] sm:$0xf] %vm285, 0
          %294 = vst.msk [vmem:[#allocation2 + $0x1c] sm:$0xf] %vm285, 0
          %295 = vst.msk [vmem:[#allocation2 + $0x20] sm:$0x1] %vm288, 0
          %296 = vst.msk [vmem:[#allocation2 + $0x24] sm:$0xf] %vm285, 0
          %297 = vst.msk [vmem:[#allocation2 + $0x28] sm:$0xf] %vm285, 0
          %298 = vst.msk [vmem:[#allocation2 + $0x2c] sm:$0x1] %vm288, 0
          %v299 = vld [vmem:[%s198] sm:$0xf]
          %v300 = vld [vmem:[%s198 + $0x4] sm:$0xf]
          %v301 = vld [vmem:[%s198 + $0x8] sm:$0xf]
          %v302 = vld [vmem:[%s198 + $0xc] sm:$0xf]
          %v303 = vld [vmem:[%s198 + $0x10] sm:$0xf]
          %v304 = vld [vmem:[%s198 + $0x14] sm:$0xf]
          %v305 = vld [vmem:[%s198 + $0x18] sm:$0xf]
          %v306 = vld [vmem:[%s198 + $0x1c] sm:$0xf]
          %vm307 = vsmask.f32 4368
          %vm308 = vmor %vm243, %vm307
          %v310 = vshrl.u32 %v299, 16
          %v312 = vrot.slane %v310, 7
          %v313 = vshll.u32 %v299, 16
          %v315 = vor.u32 %v312, %v313
          %v316 = vrot.slane %v312, 4
          %v318 = vshrl.u32 %v300, 16
          %v320 = vrot.slane %v318, 7
          %v321 = vshll.u32 %v300, 16
          %v323 = vor.u32 %v320, %v321
          %v324 = vsel %vm308, %v316, %v323
          %v325 = vrot.slane %v320, 4
          %v327 = vshrl.u32 %v301, 16
          %v329 = vrot.slane %v327, 7
          %v330 = vshll.u32 %v301, 16
          %v332 = vor.u32 %v329, %v330
          %v333 = vrot.slane %v329, 4
          %v335 = vshrl.u32 %v302, 16
          %v337 = vrot.slane %v335, 7
          %v338 = vshll.u32 %v302, 16
          %v340 = vor.u32 %v337, %v338
          %v341 = vsel %vm308, %v333, %v340
          %v342 = vrot.slane %v337, 4
          %v344 = vshrl.u32 %v303, 16
          %v346 = vrot.slane %v344, 7
          %v347 = vshll.u32 %v303, 16
          %v349 = vor.u32 %v346, %v347
          %v350 = vrot.slane %v346, 4
          %v352 = vshrl.u32 %v304, 16
          %v354 = vrot.slane %v352, 7
          %v355 = vshll.u32 %v304, 16
          %v357 = vor.u32 %v354, %v355
          %v358 = vsel %vm308, %v350, %v357
          %v359 = vrot.slane %v354, 4
          %v361 = vshrl.u32 %v305, 16
          %v363 = vrot.slane %v361, 7
          %v364 = vshll.u32 %v305, 16
          %v366 = vor.u32 %v363, %v364
          %v367 = vrot.slane %v363, 4
          %v369 = vshrl.u32 %v306, 16
          %v371 = vrot.slane %v369, 7
          %v372 = vshll.u32 %v306, 16
          %v374 = vor.u32 %v371, %v372
          %v375 = vsel %vm308, %v367, %v374
          %v376 = vrot.slane %v371, 4
          %377 = vrot.lane.b32.xlu0 %v315, 1
          %v378 = vpop.permute.xlu0 %377
          %379 = vrot.lane.b32.xlu0 %v324, 1
          %v380 = vpop.permute.xlu0 %379
          %381 = vrot.lane.b32.xlu0 %v325, 1
          %v382 = vpop.permute.xlu0 %381
          %383 = vrot.lane.b32.xlu0 %v332, 1
          %v384 = vpop.permute.xlu0 %383
          %385 = vrot.lane.b32.xlu0 %v341, 1
          %v386 = vpop.permute.xlu0 %385
          %387 = vrot.lane.b32.xlu0 %v342, 1
          %v388 = vpop.permute.xlu0 %387
          %389 = vrot.lane.b32.xlu0 %v349, 1
          %v390 = vpop.permute.xlu0 %389
          %391 = vrot.lane.b32.xlu0 %v358, 1
          %v392 = vpop.permute.xlu0 %391
          %393 = vrot.lane.b32.xlu0 %v359, 1
          %v394 = vpop.permute.xlu0 %393
          %395 = vrot.lane.b32.xlu0 %v366, 1
          %v396 = vpop.permute.xlu0 %395
          %397 = vrot.lane.b32.xlu0 %v375, 1
          %v398 = vpop.permute.xlu0 %397
          %399 = vrot.lane.b32.xlu0 %v376, 1
          %v400 = vpop.permute.xlu0 %399
          %vm413 = vcmask 134152
          %vm414 = vmand %vm413, %vm257
          %v415 = vld [vmem:[#allocation2] sm:$0xf]
          %v416 = vsel %vm414, %v378, %v415
          %417 = vst [vmem:[#allocation2] sm:$0xf] %v416
          %vm418 = vcmask 134152
          %419 = vst.msk [vmem:[#allocation2 + $0x4] sm:$0xf] %vm418, %v380
          %vm420 = vcmask 131080
          %vm421 = vmand %vm420, %vm243
          %v422 = vld [vmem:[#allocation2 + $0x8] sm:$0x1]
          %v423 = vsel %vm421, %v382, %v422
          %424 = vst [vmem:[#allocation2 + $0x8] sm:$0x1] %v423
          %v425 = vld [vmem:[#allocation2 + $0xc] sm:$0xf]
          %v426 = vsel %vm414, %v384, %v425
          %427 = vst [vmem:[#allocation2 + $0xc] sm:$0xf] %v426
          %428 = vst.msk [vmem:[#allocation2 + $0x10] sm:$0xf] %vm418, %v386
          %v429 = vld [vmem:[#allocation2 + $0x14] sm:$0x1]
          %v430 = vsel %vm421, %v388, %v429
          %431 = vst [vmem:[#allocation2 + $0x14] sm:$0x1] %v430
          %v432 = vld [vmem:[#allocation2 + $0x18] sm:$0xf]
          %v433 = vsel %vm414, %v390, %v432
          %434 = vst [vmem:[#allocation2 + $0x18] sm:$0xf] %v433
          %435 = vst.msk [vmem:[#allocation2 + $0x1c] sm:$0xf] %vm418, %v392
          %v436 = vld [vmem:[#allocation2 + $0x20] sm:$0x1]
          %v437 = vsel %vm421, %v394, %v436
          %438 = vst [vmem:[#allocation2 + $0x20] sm:$0x1] %v437
          %v439 = vld [vmem:[#allocation2 + $0x24] sm:$0xf]
          %v440 = vsel %vm414, %v396, %v439
          %441 = vst [vmem:[#allocation2 + $0x24] sm:$0xf] %v440
          %442 = vst.msk [vmem:[#allocation2 + $0x28] sm:$0xf] %vm418, %v398
          %v443 = vld [vmem:[#allocation2 + $0x2c] sm:$0x1]
          %v444 = vsel %vm421, %v400, %v443
          %445 = vst [vmem:[#allocation2 + $0x2c] sm:$0x1] %v444
          %v446 = vld [vmem:[#allocation2] sm:$0xf]
          %v447 = vld [vmem:[#allocation2 + $0x4] sm:$0xf]
          %v448 = vld [vmem:[#allocation2 + $0xc] sm:$0xf]
          %v449 = vld [vmem:[#allocation2 + $0x10] sm:$0xf]
          %v450 = vld [vmem:[#allocation2 + $0x18] sm:$0xf]
          %v451 = vld [vmem:[#allocation2 + $0x1c] sm:$0xf]
          %v452 = vld [vmem:[#allocation2 + $0x24] sm:$0xf]
          %v453 = vld [vmem:[#allocation2 + $0x28] sm:$0xf]
          %v456 = vpack.i.b16 %v448, %v446
          %v457 = vshrl.u32 %v446, 16
          %v458 = vshrl.u32 %v448, 16
          %v459 = vpack.i.b16 %v458, %v457
          %v462 = vpack.i.b16 %v452, %v450
          %v463 = vshrl.u32 %v450, 16
          %v464 = vshrl.u32 %v452, 16
          %v465 = vpack.i.b16 %v464, %v463
          %v468 = vpack.i.b16 %v449, %v447
          %v469 = vshrl.u32 %v447, 16
          %v470 = vshrl.u32 %v449, 16
          %v471 = vpack.i.b16 %v470, %v469
          %v474 = vpack.i.b16 %v453, %v451
          %v475 = vshrl.u32 %v451, 16
          %v476 = vshrl.u32 %v453, 16
          %v477 = vpack.i.b16 %v476, %v475
          %v480 = vunpack.c.l.s4 1983009808
          %v481 = vunpack.c.0.s8 %v480
          %v482 = vlaneseq
          %v483 = vshrl.u32 %v482, 7
          %v484 = vsub.s32 %v481, %v483
          %v485 = vrot.slane %v456, %v484
          %v488 = vunpack.c.l.s4 1983009808
          %v489 = vunpack.c.0.s8 %v488
          %v490 = vlaneseq
          %v491 = vshrl.u32 %v490, 7
          %v492 = vsub.s32 %v489, %v491
          %v493 = vrot.slane %v462, %v492
          %v494 = vcombine.low %v485, %v493
          %v495 = vcombine.high %v485, %v493
          %v497 = vunpack.c.l.s4 1934713408
          %v498 = vunpack.c.0.s8 %v497
          %v499 = vlaneseq
          %v500 = vshrl.u32 %v499, 7
          %v501 = vsub.s32 %v498, %v500
          %v502 = vrot.slane %v494, %v501
          %v504 = vunpack.c.l.s4 1934713408
          %v505 = vunpack.c.0.s8 %v504
          %v506 = vlaneseq
          %v507 = vshrl.u32 %v506, 7
          %v508 = vsub.s32 %v505, %v507
          %v509 = vrot.slane %v495, %v508
          %v510 = vcombine.high %v502, 0
          %v511 = vcombine.high %v509, 0
          %v514 = vunpack.c.l.s4 1983009808
          %v515 = vunpack.c.0.s8 %v514
          %v516 = vlaneseq
          %v517 = vshrl.u32 %v516, 7
          %v518 = vsub.s32 %v515, %v517
          %v519 = vrot.slane %v459, %v518
          %v522 = vunpack.c.l.s4 1983009808
          %v523 = vunpack.c.0.s8 %v522
          %v524 = vlaneseq
          %v525 = vshrl.u32 %v524, 7
          %v526 = vsub.s32 %v523, %v525
          %v527 = vrot.slane %v465, %v526
          %v528 = vcombine.low %v519, %v527
          %v529 = vcombine.high %v519, %v527
          %v531 = vunpack.c.l.s4 1934713408
          %v532 = vunpack.c.0.s8 %v531
          %v533 = vlaneseq
          %v534 = vshrl.u32 %v533, 7
          %v535 = vsub.s32 %v532, %v534
          %v536 = vrot.slane %v528, %v535
          %v538 = vunpack.c.l.s4 1934713408
          %v539 = vunpack.c.0.s8 %v538
          %v540 = vlaneseq
          %v541 = vshrl.u32 %v540, 7
          %v542 = vsub.s32 %v539, %v541
          %v543 = vrot.slane %v529, %v542
          %v544 = vcombine.high %v536, 0
          %v545 = vcombine.high %v543, 0
          %v548 = vunpack.c.l.s4 1983009808
          %v549 = vunpack.c.0.s8 %v548
          %v550 = vlaneseq
          %v551 = vshrl.u32 %v550, 7
          %v552 = vsub.s32 %v549, %v551
          %v553 = vrot.slane %v468, %v552
          %v556 = vunpack.c.l.s4 1983009808
          %v557 = vunpack.c.0.s8 %v556
          %v558 = vlaneseq
          %v559 = vshrl.u32 %v558, 7
          %v560 = vsub.s32 %v557, %v559
          %v561 = vrot.slane %v474, %v560
          %v562 = vcombine.low %v553, %v561
          %v563 = vcombine.high %v553, %v561
          %v565 = vunpack.c.l.s4 1934713408
          %v566 = vunpack.c.0.s8 %v565
          %v567 = vlaneseq
          %v568 = vshrl.u32 %v567, 7
          %v569 = vsub.s32 %v566, %v568
          %v570 = vrot.slane %v562, %v569
          %v572 = vunpack.c.l.s4 1934713408
          %v573 = vunpack.c.0.s8 %v572
          %v574 = vlaneseq
          %v575 = vshrl.u32 %v574, 7
          %v576 = vsub.s32 %v573, %v575
          %v577 = vrot.slane %v563, %v576
          %v578 = vcombine.high %v570, 0
          %v579 = vcombine.high %v577, 0
          %v582 = vunpack.c.l.s4 1983009808
          %v583 = vunpack.c.0.s8 %v582
          %v584 = vlaneseq
          %v585 = vshrl.u32 %v584, 7
          %v586 = vsub.s32 %v583, %v585
          %v587 = vrot.slane %v471, %v586
          %v590 = vunpack.c.l.s4 1983009808
          %v591 = vunpack.c.0.s8 %v590
          %v592 = vlaneseq
          %v593 = vshrl.u32 %v592, 7
          %v594 = vsub.s32 %v591, %v593
          %v595 = vrot.slane %v477, %v594
          %v596 = vcombine.low %v587, %v595
          %v597 = vcombine.high %v587, %v595
          %v599 = vunpack.c.l.s4 1934713408
          %v600 = vunpack.c.0.s8 %v599
          %v601 = vlaneseq
          %v602 = vshrl.u32 %v601, 7
          %v603 = vsub.s32 %v600, %v602
          %v604 = vrot.slane %v596, %v603
          %v606 = vunpack.c.l.s4 1934713408
          %v607 = vunpack.c.0.s8 %v606
          %v608 = vlaneseq
          %v609 = vshrl.u32 %v608, 7
          %v610 = vsub.s32 %v607, %v609
          %v611 = vrot.slane %v597, %v610
          %v612 = vcombine.high %v604, 0
          %v613 = vcombine.high %v611, 0
          %v615 = vunpack.c.l.b16 %v536
          %v616 = vpack.c.b16 %v615, %v615
          %617 = vrot.lane.b32.xlu0 %v616, 16
          %v618 = vpop.permute.xlu0 %617
          %v620 = vunpack.c.l.b16 %v510
          %v621 = vpack.c.b16 %v620, %v620
          %622 = vrot.lane.b32.xlu0 %v621, 32
          %v623 = vpop.permute.xlu0 %622
          %v625 = vunpack.c.l.b16 %v544
          %v626 = vpack.c.b16 %v625, %v625
          %627 = vrot.lane.b32.xlu0 %v626, 48
          %v628 = vpop.permute.xlu0 %627
          %v630 = vunpack.c.l.b16 %v509
          %v631 = vpack.c.b16 %v630, %v630
          %632 = vrot.lane.b32.xlu0 %v631, 64
          %v633 = vpop.permute.xlu0 %632
          %v635 = vunpack.c.l.b16 %v543
          %v636 = vpack.c.b16 %v635, %v635
          %637 = vrot.lane.b32.xlu0 %v636, 80
          %v638 = vpop.permute.xlu0 %637
          %v640 = vunpack.c.l.b16 %v511
          %v641 = vpack.c.b16 %v640, %v640
          %642 = vrot.lane.b32.xlu0 %v641, 96
          %v643 = vpop.permute.xlu0 %642
          %v645 = vunpack.c.l.b16 %v545
          %v646 = vpack.c.b16 %v645, %v645
          %647 = vrot.lane.b32.xlu0 %v646, 112
          %v648 = vpop.permute.xlu0 %647
          %v650 = vunpack.c.l.b16 %v604
          %v651 = vpack.c.b16 %v650, %v650
          %652 = vrot.lane.b32.xlu0 %v651, 16
          %v653 = vpop.permute.xlu0 %652
          %v655 = vunpack.c.l.b16 %v578
          %v656 = vpack.c.b16 %v655, %v655
          %657 = vrot.lane.b32.xlu0 %v656, 32
          %v658 = vpop.permute.xlu0 %657
          %v660 = vunpack.c.l.b16 %v612
          %v661 = vpack.c.b16 %v660, %v660
          %662 = vrot.lane.b32.xlu0 %v661, 48
          %v663 = vpop.permute.xlu0 %662
          %v665 = vunpack.c.l.b16 %v577
          %v666 = vpack.c.b16 %v665, %v665
          %667 = vrot.lane.b32.xlu0 %v666, 64
          %v668 = vpop.permute.xlu0 %667
          %v670 = vunpack.c.l.b16 %v611
          %v671 = vpack.c.b16 %v670, %v670
          %672 = vrot.lane.b32.xlu0 %v671, 80
          %v673 = vpop.permute.xlu0 %672
          %v675 = vunpack.c.l.b16 %v579
          %v676 = vpack.c.b16 %v675, %v675
          %677 = vrot.lane.b32.xlu0 %v676, 96
          %v678 = vpop.permute.xlu0 %677
          %v680 = vunpack.c.l.b16 %v613
          %v681 = vpack.c.b16 %v680, %v680
          %682 = vrot.lane.b32.xlu0 %v681, 112
          %v683 = vpop.permute.xlu0 %682
          %vm684 = vcmask 130048
          %v687 = vsel %vm684, %v502, %v618
          %vm688 = vcmask 261120
          %v690 = vsel %vm688, %v687, %v623
          %vm691 = vcmask 392192
          %v693 = vsel %vm691, %v690, %v628
          %vm694 = vcmask 523264
          %v696 = vsel %vm694, %v693, %v633
          %vm697 = vcmask 654336
          %v699 = vsel %vm697, %v696, %v638
          %vm700 = vcmask 785408
          %v702 = vsel %vm700, %v699, %v643
          %vm703 = vcmask 916480
          %v705 = vsel %vm703, %v702, %v648
          %v708 = vsel %vm684, %v570, %v653
          %v710 = vsel %vm688, %v708, %v658
          %v712 = vsel %vm691, %v710, %v663
          %v714 = vsel %vm694, %v712, %v668
          %v716 = vsel %vm697, %v714, %v673
          %v718 = vsel %vm700, %v716, %v678
          %v720 = vsel %vm703, %v718, %v683
          %v723 = vunpack.c.l.b16 %v705
          %v724 = vunpack.c.l.b16 %v720
          %v725 = vpack.c.b16 %v724, %v723
          %727 = vst [vmem:[#allocation3] sm:$0x33] %v725
          %v728 = vld [vmem:[#allocation2] sm:$0xf]
          %v729 = vld [vmem:[#allocation2 + $0x4] sm:$0xf]
          %v730 = vld [vmem:[#allocation2 + $0xc] sm:$0xf]
          %v731 = vld [vmem:[#allocation2 + $0x10] sm:$0xf]
          %v732 = vld [vmem:[#allocation2 + $0x18] sm:$0xf]
          %v733 = vld [vmem:[#allocation2 + $0x1c] sm:$0xf]
          %v734 = vld [vmem:[#allocation2 + $0x24] sm:$0xf]
          %v735 = vld [vmem:[#allocation2 + $0x28] sm:$0xf]
          %744 = vrot.lane.b32.xlu0 %v728, 127
          %v745 = vpop.permute.xlu0 %744
          %746 = vrot.lane.b32.xlu0 %v729, 127
          %v747 = vpop.permute.xlu0 %746
          %748 = vrot.lane.b32.xlu0 %v730, 127
          %v749 = vpop.permute.xlu0 %748
          %750 = vrot.lane.b32.xlu0 %v731, 127
          %v751 = vpop.permute.xlu0 %750
          %752 = vrot.lane.b32.xlu0 %v732, 127
          %v753 = vpop.permute.xlu0 %752
          %754 = vrot.lane.b32.xlu0 %v733, 127
          %v755 = vpop.permute.xlu0 %754
          %756 = vrot.lane.b32.xlu0 %v734, 127
          %v757 = vpop.permute.xlu0 %756
          %758 = vrot.lane.b32.xlu0 %v735, 127
          %v759 = vpop.permute.xlu0 %758
          %v762 = vpack.i.b16 %v749, %v745
          %v763 = vshrl.u32 %v745, 16
          %v764 = vshrl.u32 %v749, 16
          %v765 = vpack.i.b16 %v764, %v763
          %v768 = vpack.i.b16 %v757, %v753
          %v769 = vshrl.u32 %v753, 16
          %v770 = vshrl.u32 %v757, 16
          %v771 = vpack.i.b16 %v770, %v769
          %v774 = vpack.i.b16 %v751, %v747
          %v775 = vshrl.u32 %v747, 16
          %v776 = vshrl.u32 %v751, 16
          %v777 = vpack.i.b16 %v776, %v775
          %v780 = vpack.i.b16 %v759, %v755
          %v781 = vshrl.u32 %v755, 16
          %v782 = vshrl.u32 %v759, 16
          %v783 = vpack.i.b16 %v782, %v781
          %v786 = vunpack.c.l.s4 1983009808
          %v787 = vunpack.c.0.s8 %v786
          %v788 = vlaneseq
          %v789 = vshrl.u32 %v788, 7
          %v790 = vsub.s32 %v787, %v789
          %v791 = vrot.slane %v762, %v790
          %v794 = vunpack.c.l.s4 1983009808
          %v795 = vunpack.c.0.s8 %v794
          %v796 = vlaneseq
          %v797 = vshrl.u32 %v796, 7
          %v798 = vsub.s32 %v795, %v797
          %v799 = vrot.slane %v768, %v798
          %v800 = vcombine.low %v791, %v799
          %v801 = vcombine.high %v791, %v799
          %v803 = vunpack.c.l.s4 1934713408
          %v804 = vunpack.c.0.s8 %v803
          %v805 = vlaneseq
          %v806 = vshrl.u32 %v805, 7
          %v807 = vsub.s32 %v804, %v806
          %v808 = vrot.slane %v800, %v807
          %v810 = vunpack.c.l.s4 1934713408
          %v811 = vunpack.c.0.s8 %v810
          %v812 = vlaneseq
          %v813 = vshrl.u32 %v812, 7
          %v814 = vsub.s32 %v811, %v813
          %v815 = vrot.slane %v801, %v814
          %v816 = vcombine.high %v808, 0
          %v817 = vcombine.high %v815, 0
          %v820 = vunpack.c.l.s4 1983009808
          %v821 = vunpack.c.0.s8 %v820
          %v822 = vlaneseq
          %v823 = vshrl.u32 %v822, 7
          %v824 = vsub.s32 %v821, %v823
          %v825 = vrot.slane %v765, %v824
          %v828 = vunpack.c.l.s4 1983009808
          %v829 = vunpack.c.0.s8 %v828
          %v830 = vlaneseq
          %v831 = vshrl.u32 %v830, 7
          %v832 = vsub.s32 %v829, %v831
          %v833 = vrot.slane %v771, %v832
          %v834 = vcombine.low %v825, %v833
          %v835 = vcombine.high %v825, %v833
          %v837 = vunpack.c.l.s4 1934713408
          %v838 = vunpack.c.0.s8 %v837
          %v839 = vlaneseq
          %v840 = vshrl.u32 %v839, 7
          %v841 = vsub.s32 %v838, %v840
          %v842 = vrot.slane %v834, %v841
          %v844 = vunpack.c.l.s4 1934713408
          %v845 = vunpack.c.0.s8 %v844
          %v846 = vlaneseq
          %v847 = vshrl.u32 %v846, 7
          %v848 = vsub.s32 %v845, %v847
          %v849 = vrot.slane %v835, %v848
          %v850 = vcombine.high %v842, 0
          %v851 = vcombine.high %v849, 0
          %v854 = vunpack.c.l.s4 1983009808
          %v855 = vunpack.c.0.s8 %v854
          %v856 = vlaneseq
          %v857 = vshrl.u32 %v856, 7
          %v858 = vsub.s32 %v855, %v857
          %v859 = vrot.slane %v774, %v858
          %v862 = vunpack.c.l.s4 1983009808
          %v863 = vunpack.c.0.s8 %v862
          %v864 = vlaneseq
          %v865 = vshrl.u32 %v864, 7
          %v866 = vsub.s32 %v863, %v865
          %v867 = vrot.slane %v780, %v866
          %v868 = vcombine.low %v859, %v867
          %v869 = vcombine.high %v859, %v867
          %v871 = vunpack.c.l.s4 1934713408
          %v872 = vunpack.c.0.s8 %v871
          %v873 = vlaneseq
          %v874 = vshrl.u32 %v873, 7
          %v875 = vsub.s32 %v872, %v874
          %v876 = vrot.slane %v868, %v875
          %v878 = vunpack.c.l.s4 1934713408
          %v879 = vunpack.c.0.s8 %v878
          %v880 = vlaneseq
          %v881 = vshrl.u32 %v880, 7
          %v882 = vsub.s32 %v879, %v881
          %v883 = vrot.slane %v869, %v882
          %v884 = vcombine.high %v876, 0
          %v885 = vcombine.high %v883, 0
          %v888 = vunpack.c.l.s4 1983009808
          %v889 = vunpack.c.0.s8 %v888
          %v890 = vlaneseq
          %v891 = vshrl.u32 %v890, 7
          %v892 = vsub.s32 %v889, %v891
          %v893 = vrot.slane %v777, %v892
          %v896 = vunpack.c.l.s4 1983009808
          %v897 = vunpack.c.0.s8 %v896
          %v898 = vlaneseq
          %v899 = vshrl.u32 %v898, 7
          %v900 = vsub.s32 %v897, %v899
          %v901 = vrot.slane %v783, %v900
          %v902 = vcombine.low %v893, %v901
          %v903 = vcombine.high %v893, %v901
          %v905 = vunpack.c.l.s4 1934713408
          %v906 = vunpack.c.0.s8 %v905
          %v907 = vlaneseq
          %v908 = vshrl.u32 %v907, 7
          %v909 = vsub.s32 %v906, %v908
          %v910 = vrot.slane %v902, %v909
          %v912 = vunpack.c.l.s4 1934713408
          %v913 = vunpack.c.0.s8 %v912
          %v914 = vlaneseq
          %v915 = vshrl.u32 %v914, 7
          %v916 = vsub.s32 %v913, %v915
          %v917 = vrot.slane %v903, %v916
          %v918 = vcombine.high %v910, 0
          %v919 = vcombine.high %v917, 0
          %v921 = vunpack.c.l.b16 %v842
          %v922 = vpack.c.b16 %v921, %v921
          %923 = vrot.lane.b32.xlu0 %v922, 16
          %v924 = vpop.permute.xlu0 %923
          %v926 = vunpack.c.l.b16 %v816
          %v927 = vpack.c.b16 %v926, %v926
          %928 = vrot.lane.b32.xlu0 %v927, 32
          %v929 = vpop.permute.xlu0 %928
          %v931 = vunpack.c.l.b16 %v850
          %v932 = vpack.c.b16 %v931, %v931
          %933 = vrot.lane.b32.xlu0 %v932, 48
          %v934 = vpop.permute.xlu0 %933
          %v936 = vunpack.c.l.b16 %v815
          %v937 = vpack.c.b16 %v936, %v936
          %938 = vrot.lane.b32.xlu0 %v937, 64
          %v939 = vpop.permute.xlu0 %938
          %v941 = vunpack.c.l.b16 %v849
          %v942 = vpack.c.b16 %v941, %v941
          %943 = vrot.lane.b32.xlu0 %v942, 80
          %v944 = vpop.permute.xlu0 %943
          %v946 = vunpack.c.l.b16 %v817
          %v947 = vpack.c.b16 %v946, %v946
          %948 = vrot.lane.b32.xlu0 %v947, 96
          %v949 = vpop.permute.xlu0 %948
          %v951 = vunpack.c.l.b16 %v851
          %v952 = vpack.c.b16 %v951, %v951
          %953 = vrot.lane.b32.xlu0 %v952, 112
          %v954 = vpop.permute.xlu0 %953
          %v956 = vunpack.c.l.b16 %v910
          %v957 = vpack.c.b16 %v956, %v956
          %958 = vrot.lane.b32.xlu0 %v957, 16
          %v959 = vpop.permute.xlu0 %958
          %v961 = vunpack.c.l.b16 %v884
          %v962 = vpack.c.b16 %v961, %v961
          %963 = vrot.lane.b32.xlu0 %v962, 32
          %v964 = vpop.permute.xlu0 %963
          %v966 = vunpack.c.l.b16 %v918
          %v967 = vpack.c.b16 %v966, %v966
          %968 = vrot.lane.b32.xlu0 %v967, 48
          %v969 = vpop.permute.xlu0 %968
          %v971 = vunpack.c.l.b16 %v883
          %v972 = vpack.c.b16 %v971, %v971
          %973 = vrot.lane.b32.xlu0 %v972, 64
          %v974 = vpop.permute.xlu0 %973
          %v976 = vunpack.c.l.b16 %v917
          %v977 = vpack.c.b16 %v976, %v976
          %978 = vrot.lane.b32.xlu0 %v977, 80
          %v979 = vpop.permute.xlu0 %978
          %v981 = vunpack.c.l.b16 %v885
          %v982 = vpack.c.b16 %v981, %v981
          %983 = vrot.lane.b32.xlu0 %v982, 96
          %v984 = vpop.permute.xlu0 %983
          %v986 = vunpack.c.l.b16 %v919
          %v987 = vpack.c.b16 %v986, %v986
          %988 = vrot.lane.b32.xlu0 %v987, 112
          %v989 = vpop.permute.xlu0 %988
          %v992 = vsel %vm684, %v808, %v924
          %v994 = vsel %vm688, %v992, %v929
          %v996 = vsel %vm691, %v994, %v934
          %v998 = vsel %vm694, %v996, %v939
          %v1000 = vsel %vm697, %v998, %v944
          %v1002 = vsel %vm700, %v1000, %v949
          %v1004 = vsel %vm703, %v1002, %v954
          %v1007 = vsel %vm684, %v876, %v959
          %v1009 = vsel %vm688, %v1007, %v964
          %v1011 = vsel %vm691, %v1009, %v969
          %v1013 = vsel %vm694, %v1011, %v974
          %v1015 = vsel %vm697, %v1013, %v979
          %v1017 = vsel %vm700, %v1015, %v984
          %v1019 = vsel %vm703, %v1017, %v989
          %v1022 = vunpack.c.l.b16 %v1004
          %v1023 = vunpack.c.l.b16 %v1019
          %v1024 = vpack.c.b16 %v1023, %v1022
          %v1025 = vrot.slane %v1024, 6
          %1027 = vst [vmem:[#allocation3] sm:$0xcc] %v1025
          %v1028 = vld [vmem:[#allocation2] sm:$0xf]
          %v1029 = vld [vmem:[#allocation2 + $0x4] sm:$0xf]
          %v1030 = vld [vmem:[#allocation2 + $0xc] sm:$0xf]
          %v1031 = vld [vmem:[#allocation2 + $0x10] sm:$0xf]
          %v1032 = vld [vmem:[#allocation2 + $0x18] sm:$0xf]
          %v1033 = vld [vmem:[#allocation2 + $0x1c] sm:$0xf]
          %v1034 = vld [vmem:[#allocation2 + $0x24] sm:$0xf]
          %v1035 = vld [vmem:[#allocation2 + $0x28] sm:$0xf]
          %1044 = vrot.lane.b32.xlu0 %v1028, 126
          %v1045 = vpop.permute.xlu0 %1044
          %1046 = vrot.lane.b32.xlu0 %v1029, 126
          %v1047 = vpop.permute.xlu0 %1046
          %1048 = vrot.lane.b32.xlu0 %v1030, 126
          %v1049 = vpop.permute.xlu0 %1048
          %1050 = vrot.lane.b32.xlu0 %v1031, 126
          %v1051 = vpop.permute.xlu0 %1050
          %1052 = vrot.lane.b32.xlu0 %v1032, 126
          %v1053 = vpop.permute.xlu0 %1052
          %1054 = vrot.lane.b32.xlu0 %v1033, 126
          %v1055 = vpop.permute.xlu0 %1054
          %1056 = vrot.lane.b32.xlu0 %v1034, 126
          %v1057 = vpop.permute.xlu0 %1056
          %1058 = vrot.lane.b32.xlu0 %v1035, 126
          %v1059 = vpop.permute.xlu0 %1058
          %v1062 = vpack.i.b16 %v1049, %v1045
          %v1063 = vshrl.u32 %v1045, 16
          %v1064 = vshrl.u32 %v1049, 16
          %v1065 = vpack.i.b16 %v1064, %v1063
          %v1068 = vpack.i.b16 %v1057, %v1053
          %v1069 = vshrl.u32 %v1053, 16
          %v1070 = vshrl.u32 %v1057, 16
          %v1071 = vpack.i.b16 %v1070, %v1069
          %v1074 = vpack.i.b16 %v1051, %v1047
          %v1075 = vshrl.u32 %v1047, 16
          %v1076 = vshrl.u32 %v1051, 16
          %v1077 = vpack.i.b16 %v1076, %v1075
          %v1080 = vpack.i.b16 %v1059, %v1055
          %v1081 = vshrl.u32 %v1055, 16
          %v1082 = vshrl.u32 %v1059, 16
          %v1083 = vpack.i.b16 %v1082, %v1081
          %v1086 = vunpack.c.l.s4 1983009808
          %v1087 = vunpack.c.0.s8 %v1086
          %v1088 = vlaneseq
          %v1089 = vshrl.u32 %v1088, 7
          %v1090 = vsub.s32 %v1087, %v1089
          %v1091 = vrot.slane %v1062, %v1090
          %v1094 = vunpack.c.l.s4 1983009808
          %v1095 = vunpack.c.0.s8 %v1094
          %v1096 = vlaneseq
          %v1097 = vshrl.u32 %v1096, 7
          %v1098 = vsub.s32 %v1095, %v1097
          %v1099 = vrot.slane %v1068, %v1098
          %v1100 = vcombine.low %v1091, %v1099
          %v1101 = vcombine.high %v1091, %v1099
          %v1103 = vunpack.c.l.s4 1934713408
          %v1104 = vunpack.c.0.s8 %v1103
          %v1105 = vlaneseq
          %v1106 = vshrl.u32 %v1105, 7
          %v1107 = vsub.s32 %v1104, %v1106
          %v1108 = vrot.slane %v1100, %v1107
          %v1110 = vunpack.c.l.s4 1934713408
          %v1111 = vunpack.c.0.s8 %v1110
          %v1112 = vlaneseq
          %v1113 = vshrl.u32 %v1112, 7
          %v1114 = vsub.s32 %v1111, %v1113
          %v1115 = vrot.slane %v1101, %v1114
          %v1116 = vcombine.high %v1108, 0
          %v1117 = vcombine.high %v1115, 0
          %v1120 = vunpack.c.l.s4 1983009808
          %v1121 = vunpack.c.0.s8 %v1120
          %v1122 = vlaneseq
          %v1123 = vshrl.u32 %v1122, 7
          %v1124 = vsub.s32 %v1121, %v1123
          %v1125 = vrot.slane %v1065, %v1124
          %v1128 = vunpack.c.l.s4 1983009808
          %v1129 = vunpack.c.0.s8 %v1128
          %v1130 = vlaneseq
          %v1131 = vshrl.u32 %v1130, 7
          %v1132 = vsub.s32 %v1129, %v1131
          %v1133 = vrot.slane %v1071, %v1132
          %v1134 = vcombine.low %v1125, %v1133
          %v1135 = vcombine.high %v1125, %v1133
          %v1137 = vunpack.c.l.s4 1934713408
          %v1138 = vunpack.c.0.s8 %v1137
          %v1139 = vlaneseq
          %v1140 = vshrl.u32 %v1139, 7
          %v1141 = vsub.s32 %v1138, %v1140
          %v1142 = vrot.slane %v1134, %v1141
          %v1144 = vunpack.c.l.s4 1934713408
          %v1145 = vunpack.c.0.s8 %v1144
          %v1146 = vlaneseq
          %v1147 = vshrl.u32 %v1146, 7
          %v1148 = vsub.s32 %v1145, %v1147
          %v1149 = vrot.slane %v1135, %v1148
          %v1150 = vcombine.high %v1142, 0
          %v1151 = vcombine.high %v1149, 0
          %v1154 = vunpack.c.l.s4 1983009808
          %v1155 = vunpack.c.0.s8 %v1154
          %v1156 = vlaneseq
          %v1157 = vshrl.u32 %v1156, 7
          %v1158 = vsub.s32 %v1155, %v1157
          %v1159 = vrot.slane %v1074, %v1158
          %v1162 = vunpack.c.l.s4 1983009808
          %v1163 = vunpack.c.0.s8 %v1162
          %v1164 = vlaneseq
          %v1165 = vshrl.u32 %v1164, 7
          %v1166 = vsub.s32 %v1163, %v1165
          %v1167 = vrot.slane %v1080, %v1166
          %v1168 = vcombine.low %v1159, %v1167
          %v1169 = vcombine.high %v1159, %v1167
          %v1171 = vunpack.c.l.s4 1934713408
          %v1172 = vunpack.c.0.s8 %v1171
          %v1173 = vlaneseq
          %v1174 = vshrl.u32 %v1173, 7
          %v1175 = vsub.s32 %v1172, %v1174
          %v1176 = vrot.slane %v1168, %v1175
          %v1178 = vunpack.c.l.s4 1934713408
          %v1179 = vunpack.c.0.s8 %v1178
          %v1180 = vlaneseq
          %v1181 = vshrl.u32 %v1180, 7
          %v1182 = vsub.s32 %v1179, %v1181
          %v1183 = vrot.slane %v1169, %v1182
          %v1184 = vcombine.high %v1176, 0
          %v1185 = vcombine.high %v1183, 0
          %v1188 = vunpack.c.l.s4 1983009808
          %v1189 = vunpack.c.0.s8 %v1188
          %v1190 = vlaneseq
          %v1191 = vshrl.u32 %v1190, 7
          %v1192 = vsub.s32 %v1189, %v1191
          %v1193 = vrot.slane %v1077, %v1192
          %v1196 = vunpack.c.l.s4 1983009808
          %v1197 = vunpack.c.0.s8 %v1196
          %v1198 = vlaneseq
          %v1199 = vshrl.u32 %v1198, 7
          %v1200 = vsub.s32 %v1197, %v1199
          %v1201 = vrot.slane %v1083, %v1200
          %v1202 = vcombine.low %v1193, %v1201
          %v1203 = vcombine.high %v1193, %v1201
          %v1205 = vunpack.c.l.s4 1934713408
          %v1206 = vunpack.c.0.s8 %v1205
          %v1207 = vlaneseq
          %v1208 = vshrl.u32 %v1207, 7
          %v1209 = vsub.s32 %v1206, %v1208
          %v1210 = vrot.slane %v1202, %v1209
          %v1212 = vunpack.c.l.s4 1934713408
          %v1213 = vunpack.c.0.s8 %v1212
          %v1214 = vlaneseq
          %v1215 = vshrl.u32 %v1214, 7
          %v1216 = vsub.s32 %v1213, %v1215
          %v1217 = vrot.slane %v1203, %v1216
          %v1218 = vcombine.high %v1210, 0
          %v1219 = vcombine.high %v1217, 0
          %v1221 = vunpack.c.l.b16 %v1142
          %v1222 = vpack.c.b16 %v1221, %v1221
          %1223 = vrot.lane.b32.xlu0 %v1222, 16
          %v1224 = vpop.permute.xlu0 %1223
          %v1226 = vunpack.c.l.b16 %v1116
          %v1227 = vpack.c.b16 %v1226, %v1226
          %1228 = vrot.lane.b32.xlu0 %v1227, 32
          %v1229 = vpop.permute.xlu0 %1228
          %v1231 = vunpack.c.l.b16 %v1150
          %v1232 = vpack.c.b16 %v1231, %v1231
          %1233 = vrot.lane.b32.xlu0 %v1232, 48
          %v1234 = vpop.permute.xlu0 %1233
          %v1236 = vunpack.c.l.b16 %v1115
          %v1237 = vpack.c.b16 %v1236, %v1236
          %1238 = vrot.lane.b32.xlu0 %v1237, 64
          %v1239 = vpop.permute.xlu0 %1238
          %v1241 = vunpack.c.l.b16 %v1149
          %v1242 = vpack.c.b16 %v1241, %v1241
          %1243 = vrot.lane.b32.xlu0 %v1242, 80
          %v1244 = vpop.permute.xlu0 %1243
          %v1246 = vunpack.c.l.b16 %v1117
          %v1247 = vpack.c.b16 %v1246, %v1246
          %1248 = vrot.lane.b32.xlu0 %v1247, 96
          %v1249 = vpop.permute.xlu0 %1248
          %v1251 = vunpack.c.l.b16 %v1151
          %v1252 = vpack.c.b16 %v1251, %v1251
          %1253 = vrot.lane.b32.xlu0 %v1252, 112
          %v1254 = vpop.permute.xlu0 %1253
          %v1256 = vunpack.c.l.b16 %v1210
          %v1257 = vpack.c.b16 %v1256, %v1256
          %1258 = vrot.lane.b32.xlu0 %v1257, 16
          %v1259 = vpop.permute.xlu0 %1258
          %v1261 = vunpack.c.l.b16 %v1184
          %v1262 = vpack.c.b16 %v1261, %v1261
          %1263 = vrot.lane.b32.xlu0 %v1262, 32
          %v1264 = vpop.permute.xlu0 %1263
          %v1266 = vunpack.c.l.b16 %v1218
          %v1267 = vpack.c.b16 %v1266, %v1266
          %1268 = vrot.lane.b32.xlu0 %v1267, 48
          %v1269 = vpop.permute.xlu0 %1268
          %v1271 = vunpack.c.l.b16 %v1183
          %v1272 = vpack.c.b16 %v1271, %v1271
          %1273 = vrot.lane.b32.xlu0 %v1272, 64
          %v1274 = vpop.permute.xlu0 %1273
          %v1276 = vunpack.c.l.b16 %v1217
          %v1277 = vpack.c.b16 %v1276, %v1276
          %1278 = vrot.lane.b32.xlu0 %v1277, 80
          %v1279 = vpop.permute.xlu0 %1278
          %v1281 = vunpack.c.l.b16 %v1185
          %v1282 = vpack.c.b16 %v1281, %v1281
          %1283 = vrot.lane.b32.xlu0 %v1282, 96
          %v1284 = vpop.permute.xlu0 %1283
          %v1286 = vunpack.c.l.b16 %v1219
          %v1287 = vpack.c.b16 %v1286, %v1286
          %1288 = vrot.lane.b32.xlu0 %v1287, 112
          %v1289 = vpop.permute.xlu0 %1288
          %v1292 = vsel %vm684, %v1108, %v1224
          %v1294 = vsel %vm688, %v1292, %v1229
          %v1296 = vsel %vm691, %v1294, %v1234
          %v1298 = vsel %vm694, %v1296, %v1239
          %v1300 = vsel %vm697, %v1298, %v1244
          %v1302 = vsel %vm700, %v1300, %v1249
          %v1304 = vsel %vm703, %v1302, %v1254
          %v1307 = vsel %vm684, %v1176, %v1259
          %v1309 = vsel %vm688, %v1307, %v1264
          %v1311 = vsel %vm691, %v1309, %v1269
          %v1313 = vsel %vm694, %v1311, %v1274
          %v1315 = vsel %vm697, %v1313, %v1279
          %v1317 = vsel %vm700, %v1315, %v1284
          %v1319 = vsel %vm703, %v1317, %v1289
          %v1322 = vunpack.c.l.b16 %v1304
          %v1323 = vunpack.c.l.b16 %v1319
          %v1324 = vpack.c.b16 %v1323, %v1322
          %1326 = vst [vmem:[#allocation3 + $0x8] sm:$0x33] %v1324
          %v1327 = vld [vmem:[#allocation2] sm:$0xf]
          %v1328 = vld [vmem:[#allocation2 + $0x4] sm:$0xf]
          %v1329 = vld [vmem:[#allocation2 + $0x8] sm:$0x1]
          %v1330 = vld [vmem:[#allocation2 + $0xc] sm:$0xf]
          %v1331 = vld [vmem:[#allocation2 + $0x10] sm:$0xf]
          %v1332 = vld [vmem:[#allocation2 + $0x14] sm:$0x1]
          %v1333 = vld [vmem:[#allocation2 + $0x18] sm:$0xf]
          %v1334 = vld [vmem:[#allocation2 + $0x1c] sm:$0xf]
          %v1335 = vld [vmem:[#allocation2 + $0x20] sm:$0x1]
          %v1336 = vld [vmem:[#allocation2 + $0x24] sm:$0xf]
          %v1337 = vld [vmem:[#allocation2 + $0x28] sm:$0xf]
          %v1338 = vld [vmem:[#allocation2 + $0x2c] sm:$0x1]
          %vm1339 = vsmask.f32 3328
          %vm1340 = vsmask.f32 7440
          %vm1341 = vmor %vm1339, %vm1340
          %v1343 = vshrl.u32 %v1327, 16
          %v1345 = vrot.slane %v1343, 4
          %v1346 = vshll.u32 %v1327, 16
          %v1348 = vrot.slane %v1346, 5
          %v1349 = vor.u32 %v1345, %v1348
          %v1350 = vrot.slane %v1349, 4
          %v1352 = vshll.u32 %v1328, 16
          %v1354 = vrot.slane %v1352, 5
          %v1355 = vsel %vm1341, %v1350, %v1354
          %v1356 = vshrl.u32 %v1328, 16
          %v1358 = vrot.slane %v1356, 4
          %v1359 = vor.u32 %v1358, %v1354
          %v1360 = vrot.slane %v1359, 4
          %v1362 = vshll.u32 %v1329, 16
          %v1364 = vrot.slane %v1362, 5
          %v1365 = vsel %vm1341, %v1360, %v1364
          %v1367 = vshrl.u32 %v1330, 16
          %v1369 = vrot.slane %v1367, 4
          %v1370 = vshll.u32 %v1330, 16
          %v1372 = vrot.slane %v1370, 5
          %v1373 = vor.u32 %v1369, %v1372
          %v1374 = vrot.slane %v1373, 4
          %v1376 = vshll.u32 %v1331, 16
          %v1378 = vrot.slane %v1376, 5
          %v1379 = vsel %vm1341, %v1374, %v1378
          %v1380 = vshrl.u32 %v1331, 16
          %v1382 = vrot.slane %v1380, 4
          %v1383 = vor.u32 %v1382, %v1378
          %v1384 = vrot.slane %v1383, 4
          %v1386 = vshll.u32 %v1332, 16
          %v1388 = vrot.slane %v1386, 5
          %v1389 = vsel %vm1341, %v1384, %v1388
          %v1391 = vshrl.u32 %v1333, 16
          %v1393 = vrot.slane %v1391, 4
          %v1394 = vshll.u32 %v1333, 16
          %v1396 = vrot.slane %v1394, 5
          %v1397 = vor.u32 %v1393, %v1396
          %v1398 = vrot.slane %v1397, 4
          %v1400 = vshll.u32 %v1334, 16
          %v1402 = vrot.slane %v1400, 5
          %v1403 = vsel %vm1341, %v1398, %v1402
          %v1404 = vshrl.u32 %v1334, 16
          %v1406 = vrot.slane %v1404, 4
          %v1407 = vor.u32 %v1406, %v1402
          %v1408 = vrot.slane %v1407, 4
          %v1410 = vshll.u32 %v1335, 16
          %v1412 = vrot.slane %v1410, 5
          %v1413 = vsel %vm1341, %v1408, %v1412
          %v1415 = vshrl.u32 %v1336, 16
          %v1417 = vrot.slane %v1415, 4
          %v1418 = vshll.u32 %v1336, 16
          %v1420 = vrot.slane %v1418, 5
          %v1421 = vor.u32 %v1417, %v1420
          %v1422 = vrot.slane %v1421, 4
          %v1424 = vshll.u32 %v1337, 16
          %v1426 = vrot.slane %v1424, 5
          %v1427 = vsel %vm1341, %v1422, %v1426
          %v1428 = vshrl.u32 %v1337, 16
          %v1430 = vrot.slane %v1428, 4
          %v1431 = vor.u32 %v1430, %v1426
          %v1432 = vrot.slane %v1431, 4
          %v1434 = vshll.u32 %v1338, 16
          %v1436 = vrot.slane %v1434, 5
          %v1437 = vsel %vm1341, %v1432, %v1436
          %v1440 = vpack.i.b16 %v1379, %v1355
          %v1441 = vshrl.u32 %v1355, 16
          %v1442 = vshrl.u32 %v1379, 16
          %v1443 = vpack.i.b16 %v1442, %v1441
          %v1446 = vpack.i.b16 %v1427, %v1403
          %v1447 = vshrl.u32 %v1403, 16
          %v1448 = vshrl.u32 %v1427, 16
          %v1449 = vpack.i.b16 %v1448, %v1447
          %v1452 = vpack.i.b16 %v1389, %v1365
          %v1453 = vshrl.u32 %v1365, 16
          %v1454 = vshrl.u32 %v1389, 16
          %v1455 = vpack.i.b16 %v1454, %v1453
          %v1458 = vpack.i.b16 %v1437, %v1413
          %v1459 = vshrl.u32 %v1413, 16
          %v1460 = vshrl.u32 %v1437, 16
          %v1461 = vpack.i.b16 %v1460, %v1459
          %v1464 = vunpack.c.l.s4 1983009808
          %v1465 = vunpack.c.0.s8 %v1464
          %v1466 = vlaneseq
          %v1467 = vshrl.u32 %v1466, 7
          %v1468 = vsub.s32 %v1465, %v1467
          %v1469 = vrot.slane %v1440, %v1468
          %v1472 = vunpack.c.l.s4 1983009808
          %v1473 = vunpack.c.0.s8 %v1472
          %v1474 = vlaneseq
          %v1475 = vshrl.u32 %v1474, 7
          %v1476 = vsub.s32 %v1473, %v1475
          %v1477 = vrot.slane %v1446, %v1476
          %v1478 = vcombine.low %v1469, %v1477
          %v1479 = vcombine.high %v1469, %v1477
          %v1481 = vunpack.c.l.s4 1934713408
          %v1482 = vunpack.c.0.s8 %v1481
          %v1483 = vlaneseq
          %v1484 = vshrl.u32 %v1483, 7
          %v1485 = vsub.s32 %v1482, %v1484
          %v1486 = vrot.slane %v1478, %v1485
          %v1488 = vunpack.c.l.s4 1934713408
          %v1489 = vunpack.c.0.s8 %v1488
          %v1490 = vlaneseq
          %v1491 = vshrl.u32 %v1490, 7
          %v1492 = vsub.s32 %v1489, %v1491
          %v1493 = vrot.slane %v1479, %v1492
          %v1494 = vcombine.high %v1486, 0
          %v1495 = vcombine.high %v1493, 0
          %v1498 = vunpack.c.l.s4 1983009808
          %v1499 = vunpack.c.0.s8 %v1498
          %v1500 = vlaneseq
          %v1501 = vshrl.u32 %v1500, 7
          %v1502 = vsub.s32 %v1499, %v1501
          %v1503 = vrot.slane %v1443, %v1502
          %v1506 = vunpack.c.l.s4 1983009808
          %v1507 = vunpack.c.0.s8 %v1506
          %v1508 = vlaneseq
          %v1509 = vshrl.u32 %v1508, 7
          %v1510 = vsub.s32 %v1507, %v1509
          %v1511 = vrot.slane %v1449, %v1510
          %v1512 = vcombine.low %v1503, %v1511
          %v1513 = vcombine.high %v1503, %v1511
          %v1515 = vunpack.c.l.s4 1934713408
          %v1516 = vunpack.c.0.s8 %v1515
          %v1517 = vlaneseq
          %v1518 = vshrl.u32 %v1517, 7
          %v1519 = vsub.s32 %v1516, %v1518
          %v1520 = vrot.slane %v1512, %v1519
          %v1522 = vunpack.c.l.s4 1934713408
          %v1523 = vunpack.c.0.s8 %v1522
          %v1524 = vlaneseq
          %v1525 = vshrl.u32 %v1524, 7
          %v1526 = vsub.s32 %v1523, %v1525
          %v1527 = vrot.slane %v1513, %v1526
          %v1528 = vcombine.high %v1520, 0
          %v1529 = vcombine.high %v1527, 0
          %v1532 = vunpack.c.l.s4 1983009808
          %v1533 = vunpack.c.0.s8 %v1532
          %v1534 = vlaneseq
          %v1535 = vshrl.u32 %v1534, 7
          %v1536 = vsub.s32 %v1533, %v1535
          %v1537 = vrot.slane %v1452, %v1536
          %v1540 = vunpack.c.l.s4 1983009808
          %v1541 = vunpack.c.0.s8 %v1540
          %v1542 = vlaneseq
          %v1543 = vshrl.u32 %v1542, 7
          %v1544 = vsub.s32 %v1541, %v1543
          %v1545 = vrot.slane %v1458, %v1544
          %v1546 = vcombine.low %v1537, %v1545
          %v1547 = vcombine.high %v1537, %v1545
          %v1549 = vunpack.c.l.s4 1934713408
          %v1550 = vunpack.c.0.s8 %v1549
          %v1551 = vlaneseq
          %v1552 = vshrl.u32 %v1551, 7
          %v1553 = vsub.s32 %v1550, %v1552
          %v1554 = vrot.slane %v1546, %v1553
          %v1556 = vunpack.c.l.s4 1934713408
          %v1557 = vunpack.c.0.s8 %v1556
          %v1558 = vlaneseq
          %v1559 = vshrl.u32 %v1558, 7
          %v1560 = vsub.s32 %v1557, %v1559
          %v1561 = vrot.slane %v1547, %v1560
          %v1562 = vcombine.high %v1554, 0
          %v1563 = vcombine.high %v1561, 0
          %v1566 = vunpack.c.l.s4 1983009808
          %v1567 = vunpack.c.0.s8 %v1566
          %v1568 = vlaneseq
          %v1569 = vshrl.u32 %v1568, 7
          %v1570 = vsub.s32 %v1567, %v1569
          %v1571 = vrot.slane %v1455, %v1570
          %v1574 = vunpack.c.l.s4 1983009808
          %v1575 = vunpack.c.0.s8 %v1574
          %v1576 = vlaneseq
          %v1577 = vshrl.u32 %v1576, 7
          %v1578 = vsub.s32 %v1575, %v1577
          %v1579 = vrot.slane %v1461, %v1578
          %v1580 = vcombine.low %v1571, %v1579
          %v1581 = vcombine.high %v1571, %v1579
          %v1583 = vunpack.c.l.s4 1934713408
          %v1584 = vunpack.c.0.s8 %v1583
          %v1585 = vlaneseq
          %v1586 = vshrl.u32 %v1585, 7
          %v1587 = vsub.s32 %v1584, %v1586
          %v1588 = vrot.slane %v1580, %v1587
          %v1590 = vunpack.c.l.s4 1934713408
          %v1591 = vunpack.c.0.s8 %v1590
          %v1592 = vlaneseq
          %v1593 = vshrl.u32 %v1592, 7
          %v1594 = vsub.s32 %v1591, %v1593
          %v1595 = vrot.slane %v1581, %v1594
          %v1596 = vcombine.high %v1588, 0
          %v1597 = vcombine.high %v1595, 0
          %v1599 = vunpack.c.l.b16 %v1520
          %v1600 = vpack.c.b16 %v1599, %v1599
          %1601 = vrot.lane.b32.xlu0 %v1600, 16
          %v1602 = vpop.permute.xlu0 %1601
          %v1604 = vunpack.c.l.b16 %v1494
          %v1605 = vpack.c.b16 %v1604, %v1604
          %1606 = vrot.lane.b32.xlu0 %v1605, 32
          %v1607 = vpop.permute.xlu0 %1606
          %v1609 = vunpack.c.l.b16 %v1528
          %v1610 = vpack.c.b16 %v1609, %v1609
          %1611 = vrot.lane.b32.xlu0 %v1610, 48
          %v1612 = vpop.permute.xlu0 %1611
          %v1614 = vunpack.c.l.b16 %v1493
          %v1615 = vpack.c.b16 %v1614, %v1614
          %1616 = vrot.lane.b32.xlu0 %v1615, 64
          %v1617 = vpop.permute.xlu0 %1616
          %v1619 = vunpack.c.l.b16 %v1527
          %v1620 = vpack.c.b16 %v1619, %v1619
          %1621 = vrot.lane.b32.xlu0 %v1620, 80
          %v1622 = vpop.permute.xlu0 %1621
          %v1624 = vunpack.c.l.b16 %v1495
          %v1625 = vpack.c.b16 %v1624, %v1624
          %1626 = vrot.lane.b32.xlu0 %v1625, 96
          %v1627 = vpop.permute.xlu0 %1626
          %v1629 = vunpack.c.l.b16 %v1529
          %v1630 = vpack.c.b16 %v1629, %v1629
          %1631 = vrot.lane.b32.xlu0 %v1630, 112
          %v1632 = vpop.permute.xlu0 %1631
          %v1634 = vunpack.c.l.b16 %v1588
          %v1635 = vpack.c.b16 %v1634, %v1634
          %1636 = vrot.lane.b32.xlu0 %v1635, 16
          %v1637 = vpop.permute.xlu0 %1636
          %v1639 = vunpack.c.l.b16 %v1562
          %v1640 = vpack.c.b16 %v1639, %v1639
          %1641 = vrot.lane.b32.xlu0 %v1640, 32
          %v1642 = vpop.permute.xlu0 %1641
          %v1644 = vunpack.c.l.b16 %v1596
          %v1645 = vpack.c.b16 %v1644, %v1644
          %1646 = vrot.lane.b32.xlu0 %v1645, 48
          %v1647 = vpop.permute.xlu0 %1646
          %v1649 = vunpack.c.l.b16 %v1561
          %v1650 = vpack.c.b16 %v1649, %v1649
          %1651 = vrot.lane.b32.xlu0 %v1650, 64
          %v1652 = vpop.permute.xlu0 %1651
          %v1654 = vunpack.c.l.b16 %v1595
          %v1655 = vpack.c.b16 %v1654, %v1654
          %1656 = vrot.lane.b32.xlu0 %v1655, 80
          %v1657 = vpop.permute.xlu0 %1656
          %v1659 = vunpack.c.l.b16 %v1563
          %v1660 = vpack.c.b16 %v1659, %v1659
          %1661 = vrot.lane.b32.xlu0 %v1660, 96
          %v1662 = vpop.permute.xlu0 %1661
          %v1664 = vunpack.c.l.b16 %v1597
          %v1665 = vpack.c.b16 %v1664, %v1664
          %1666 = vrot.lane.b32.xlu0 %v1665, 112
          %v1667 = vpop.permute.xlu0 %1666
          %v1670 = vsel %vm684, %v1486, %v1602
          %v1672 = vsel %vm688, %v1670, %v1607
          %v1674 = vsel %vm691, %v1672, %v1612
          %v1676 = vsel %vm694, %v1674, %v1617
          %v1678 = vsel %vm697, %v1676, %v1622
          %v1680 = vsel %vm700, %v1678, %v1627
          %v1682 = vsel %vm703, %v1680, %v1632
          %v1685 = vsel %vm684, %v1554, %v1637
          %v1687 = vsel %vm688, %v1685, %v1642
          %v1689 = vsel %vm691, %v1687, %v1647
          %v1691 = vsel %vm694, %v1689, %v1652
          %v1693 = vsel %vm697, %v1691, %v1657
          %v1695 = vsel %vm700, %v1693, %v1662
          %v1697 = vsel %vm703, %v1695, %v1667
          %v1700 = vunpack.c.l.b16 %v1682
          %v1701 = vunpack.c.l.b16 %v1697
          %v1702 = vpack.c.b16 %v1701, %v1700
          %v1703 = vrot.slane %v1702, 6
          %1705 = vst [vmem:[#allocation3 + $0x8] sm:$0xcc] %v1703
          %v1706 = vld [vmem:[#allocation2] sm:$0xf]
          %v1707 = vld [vmem:[#allocation2 + $0x4] sm:$0xf]
          %v1708 = vld [vmem:[#allocation2 + $0x8] sm:$0x1]
          %v1709 = vld [vmem:[#allocation2 + $0xc] sm:$0xf]
          %v1710 = vld [vmem:[#allocation2 + $0x10] sm:$0xf]
          %v1711 = vld [vmem:[#allocation2 + $0x14] sm:$0x1]
          %v1712 = vld [vmem:[#allocation2 + $0x18] sm:$0xf]
          %v1713 = vld [vmem:[#allocation2 + $0x1c] sm:$0xf]
          %v1714 = vld [vmem:[#allocation2 + $0x20] sm:$0x1]
          %v1715 = vld [vmem:[#allocation2 + $0x24] sm:$0xf]
          %v1716 = vld [vmem:[#allocation2 + $0x28] sm:$0xf]
          %v1717 = vld [vmem:[#allocation2 + $0x2c] sm:$0x1]
          %v1719 = vshrl.u32 %v1706, 16
          %v1721 = vrot.slane %v1719, 4
          %v1722 = vshll.u32 %v1706, 16
          %v1724 = vrot.slane %v1722, 5
          %v1725 = vor.u32 %v1721, %v1724
          %v1726 = vrot.slane %v1725, 4
          %v1728 = vshll.u32 %v1707, 16
          %v1730 = vrot.slane %v1728, 5
          %v1731 = vsel %vm1341, %v1726, %v1730
          %v1732 = vshrl.u32 %v1707, 16
          %v1734 = vrot.slane %v1732, 4
          %v1735 = vor.u32 %v1734, %v1730
          %v1736 = vrot.slane %v1735, 4
          %v1738 = vshll.u32 %v1708, 16
          %v1740 = vrot.slane %v1738, 5
          %v1741 = vsel %vm1341, %v1736, %v1740
          %v1743 = vshrl.u32 %v1709, 16
          %v1745 = vrot.slane %v1743, 4
          %v1746 = vshll.u32 %v1709, 16
          %v1748 = vrot.slane %v1746, 5
          %v1749 = vor.u32 %v1745, %v1748
          %v1750 = vrot.slane %v1749, 4
          %v1752 = vshll.u32 %v1710, 16
          %v1754 = vrot.slane %v1752, 5
          %v1755 = vsel %vm1341, %v1750, %v1754
          %v1756 = vshrl.u32 %v1710, 16
          %v1758 = vrot.slane %v1756, 4
          %v1759 = vor.u32 %v1758, %v1754
          %v1760 = vrot.slane %v1759, 4
          %v1762 = vshll.u32 %v1711, 16
          %v1764 = vrot.slane %v1762, 5
          %v1765 = vsel %vm1341, %v1760, %v1764
          %v1767 = vshrl.u32 %v1712, 16
          %v1769 = vrot.slane %v1767, 4
          %v1770 = vshll.u32 %v1712, 16
          %v1772 = vrot.slane %v1770, 5
          %v1773 = vor.u32 %v1769, %v1772
          %v1774 = vrot.slane %v1773, 4
          %v1776 = vshll.u32 %v1713, 16
          %v1778 = vrot.slane %v1776, 5
          %v1779 = vsel %vm1341, %v1774, %v1778
          %v1780 = vshrl.u32 %v1713, 16
          %v1782 = vrot.slane %v1780, 4
          %v1783 = vor.u32 %v1782, %v1778
          %v1784 = vrot.slane %v1783, 4
          %v1786 = vshll.u32 %v1714, 16
          %v1788 = vrot.slane %v1786, 5
          %v1789 = vsel %vm1341, %v1784, %v1788
          %v1791 = vshrl.u32 %v1715, 16
          %v1793 = vrot.slane %v1791, 4
          %v1794 = vshll.u32 %v1715, 16
          %v1796 = vrot.slane %v1794, 5
          %v1797 = vor.u32 %v1793, %v1796
          %v1798 = vrot.slane %v1797, 4
          %v1800 = vshll.u32 %v1716, 16
          %v1802 = vrot.slane %v1800, 5
          %v1803 = vsel %vm1341, %v1798, %v1802
          %v1804 = vshrl.u32 %v1716, 16
          %v1806 = vrot.slane %v1804, 4
          %v1807 = vor.u32 %v1806, %v1802
          %v1808 = vrot.slane %v1807, 4
          %v1810 = vshll.u32 %v1717, 16
          %v1812 = vrot.slane %v1810, 5
          %v1813 = vsel %vm1341, %v1808, %v1812
          %1814 = vrot.lane.b32.xlu0 %v1731, 127
          %v1815 = vpop.permute.xlu0 %1814
          %1816 = vrot.lane.b32.xlu0 %v1741, 127
          %v1817 = vpop.permute.xlu0 %1816
          %1818 = vrot.lane.b32.xlu0 %v1755, 127
          %v1819 = vpop.permute.xlu0 %1818
          %1820 = vrot.lane.b32.xlu0 %v1765, 127
          %v1821 = vpop.permute.xlu0 %1820
          %1822 = vrot.lane.b32.xlu0 %v1779, 127
          %v1823 = vpop.permute.xlu0 %1822
          %1824 = vrot.lane.b32.xlu0 %v1789, 127
          %v1825 = vpop.permute.xlu0 %1824
          %1826 = vrot.lane.b32.xlu0 %v1803, 127
          %v1827 = vpop.permute.xlu0 %1826
          %1828 = vrot.lane.b32.xlu0 %v1813, 127
          %v1829 = vpop.permute.xlu0 %1828
          %v1832 = vpack.i.b16 %v1819, %v1815
          %v1833 = vshrl.u32 %v1815, 16
          %v1834 = vshrl.u32 %v1819, 16
          %v1835 = vpack.i.b16 %v1834, %v1833
          %v1838 = vpack.i.b16 %v1827, %v1823
          %v1839 = vshrl.u32 %v1823, 16
          %v1840 = vshrl.u32 %v1827, 16
          %v1841 = vpack.i.b16 %v1840, %v1839
          %v1844 = vpack.i.b16 %v1821, %v1817
          %v1845 = vshrl.u32 %v1817, 16
          %v1846 = vshrl.u32 %v1821, 16
          %v1847 = vpack.i.b16 %v1846, %v1845
          %v1850 = vpack.i.b16 %v1829, %v1825
          %v1851 = vshrl.u32 %v1825, 16
          %v1852 = vshrl.u32 %v1829, 16
          %v1853 = vpack.i.b16 %v1852, %v1851
          %v1856 = vunpack.c.l.s4 1983009808
          %v1857 = vunpack.c.0.s8 %v1856
          %v1858 = vlaneseq
          %v1859 = vshrl.u32 %v1858, 7
          %v1860 = vsub.s32 %v1857, %v1859
          %v1861 = vrot.slane %v1832, %v1860
          %v1864 = vunpack.c.l.s4 1983009808
          %v1865 = vunpack.c.0.s8 %v1864
          %v1866 = vlaneseq
          %v1867 = vshrl.u32 %v1866, 7
          %v1868 = vsub.s32 %v1865, %v1867
          %v1869 = vrot.slane %v1838, %v1868
          %v1870 = vcombine.low %v1861, %v1869
          %v1871 = vcombine.high %v1861, %v1869
          %v1873 = vunpack.c.l.s4 1934713408
          %v1874 = vunpack.c.0.s8 %v1873
          %v1875 = vlaneseq
          %v1876 = vshrl.u32 %v1875, 7
          %v1877 = vsub.s32 %v1874, %v1876
          %v1878 = vrot.slane %v1870, %v1877
          %v1880 = vunpack.c.l.s4 1934713408
          %v1881 = vunpack.c.0.s8 %v1880
          %v1882 = vlaneseq
          %v1883 = vshrl.u32 %v1882, 7
          %v1884 = vsub.s32 %v1881, %v1883
          %v1885 = vrot.slane %v1871, %v1884
          %v1886 = vcombine.high %v1878, 0
          %v1887 = vcombine.high %v1885, 0
          %v1890 = vunpack.c.l.s4 1983009808
          %v1891 = vunpack.c.0.s8 %v1890
          %v1892 = vlaneseq
          %v1893 = vshrl.u32 %v1892, 7
          %v1894 = vsub.s32 %v1891, %v1893
          %v1895 = vrot.slane %v1835, %v1894
          %v1898 = vunpack.c.l.s4 1983009808
          %v1899 = vunpack.c.0.s8 %v1898
          %v1900 = vlaneseq
          %v1901 = vshrl.u32 %v1900, 7
          %v1902 = vsub.s32 %v1899, %v1901
          %v1903 = vrot.slane %v1841, %v1902
          %v1904 = vcombine.low %v1895, %v1903
          %v1905 = vcombine.high %v1895, %v1903
          %v1907 = vunpack.c.l.s4 1934713408
          %v1908 = vunpack.c.0.s8 %v1907
          %v1909 = vlaneseq
          %v1910 = vshrl.u32 %v1909, 7
          %v1911 = vsub.s32 %v1908, %v1910
          %v1912 = vrot.slane %v1904, %v1911
          %v1914 = vunpack.c.l.s4 1934713408
          %v1915 = vunpack.c.0.s8 %v1914
          %v1916 = vlaneseq
          %v1917 = vshrl.u32 %v1916, 7
          %v1918 = vsub.s32 %v1915, %v1917
          %v1919 = vrot.slane %v1905, %v1918
          %v1920 = vcombine.high %v1912, 0
          %v1921 = vcombine.high %v1919, 0
          %v1924 = vunpack.c.l.s4 1983009808
          %v1925 = vunpack.c.0.s8 %v1924
          %v1926 = vlaneseq
          %v1927 = vshrl.u32 %v1926, 7
          %v1928 = vsub.s32 %v1925, %v1927
          %v1929 = vrot.slane %v1844, %v1928
          %v1932 = vunpack.c.l.s4 1983009808
          %v1933 = vunpack.c.0.s8 %v1932
          %v1934 = vlaneseq
          %v1935 = vshrl.u32 %v1934, 7
          %v1936 = vsub.s32 %v1933, %v1935
          %v1937 = vrot.slane %v1850, %v1936
          %v1938 = vcombine.low %v1929, %v1937
          %v1939 = vcombine.high %v1929, %v1937
          %v1941 = vunpack.c.l.s4 1934713408
          %v1942 = vunpack.c.0.s8 %v1941
          %v1943 = vlaneseq
          %v1944 = vshrl.u32 %v1943, 7
          %v1945 = vsub.s32 %v1942, %v1944
          %v1946 = vrot.slane %v1938, %v1945
          %v1948 = vunpack.c.l.s4 1934713408
          %v1949 = vunpack.c.0.s8 %v1948
          %v1950 = vlaneseq
          %v1951 = vshrl.u32 %v1950, 7
          %v1952 = vsub.s32 %v1949, %v1951
          %v1953 = vrot.slane %v1939, %v1952
          %v1954 = vcombine.high %v1946, 0
          %v1955 = vcombine.high %v1953, 0
          %v1958 = vunpack.c.l.s4 1983009808
          %v1959 = vunpack.c.0.s8 %v1958
          %v1960 = vlaneseq
          %v1961 = vshrl.u32 %v1960, 7
          %v1962 = vsub.s32 %v1959, %v1961
          %v1963 = vrot.slane %v1847, %v1962
          %v1966 = vunpack.c.l.s4 1983009808
          %v1967 = vunpack.c.0.s8 %v1966
          %v1968 = vlaneseq
          %v1969 = vshrl.u32 %v1968, 7
          %v1970 = vsub.s32 %v1967, %v1969
          %v1971 = vrot.slane %v1853, %v1970
          %v1972 = vcombine.low %v1963, %v1971
          %v1973 = vcombine.high %v1963, %v1971
          %v1975 = vunpack.c.l.s4 1934713408
          %v1976 = vunpack.c.0.s8 %v1975
          %v1977 = vlaneseq
          %v1978 = vshrl.u32 %v1977, 7
          %v1979 = vsub.s32 %v1976, %v1978
          %v1980 = vrot.slane %v1972, %v1979
          %v1982 = vunpack.c.l.s4 1934713408
          %v1983 = vunpack.c.0.s8 %v1982
          %v1984 = vlaneseq
          %v1985 = vshrl.u32 %v1984, 7
          %v1986 = vsub.s32 %v1983, %v1985
          %v1987 = vrot.slane %v1973, %v1986
          %v1988 = vcombine.high %v1980, 0
          %v1989 = vcombine.high %v1987, 0
          %v1991 = vunpack.c.l.b16 %v1912
          %v1992 = vpack.c.b16 %v1991, %v1991
          %1993 = vrot.lane.b32.xlu0 %v1992, 16
          %v1994 = vpop.permute.xlu0 %1993
          %v1996 = vunpack.c.l.b16 %v1886
          %v1997 = vpack.c.b16 %v1996, %v1996
          %1998 = vrot.lane.b32.xlu0 %v1997, 32
          %v1999 = vpop.permute.xlu0 %1998
          %v2001 = vunpack.c.l.b16 %v1920
          %v2002 = vpack.c.b16 %v2001, %v2001
          %2003 = vrot.lane.b32.xlu0 %v2002, 48
          %v2004 = vpop.permute.xlu0 %2003
          %v2006 = vunpack.c.l.b16 %v1885
          %v2007 = vpack.c.b16 %v2006, %v2006
          %2008 = vrot.lane.b32.xlu0 %v2007, 64
          %v2009 = vpop.permute.xlu0 %2008
          %v2011 = vunpack.c.l.b16 %v1919
          %v2012 = vpack.c.b16 %v2011, %v2011
          %2013 = vrot.lane.b32.xlu0 %v2012, 80
          %v2014 = vpop.permute.xlu0 %2013
          %v2016 = vunpack.c.l.b16 %v1887
          %v2017 = vpack.c.b16 %v2016, %v2016
          %2018 = vrot.lane.b32.xlu0 %v2017, 96
          %v2019 = vpop.permute.xlu0 %2018
          %v2021 = vunpack.c.l.b16 %v1921
          %v2022 = vpack.c.b16 %v2021, %v2021
          %2023 = vrot.lane.b32.xlu0 %v2022, 112
          %v2024 = vpop.permute.xlu0 %2023
          %v2026 = vunpack.c.l.b16 %v1980
          %v2027 = vpack.c.b16 %v2026, %v2026
          %2028 = vrot.lane.b32.xlu0 %v2027, 16
          %v2029 = vpop.permute.xlu0 %2028
          %v2031 = vunpack.c.l.b16 %v1954
          %v2032 = vpack.c.b16 %v2031, %v2031
          %2033 = vrot.lane.b32.xlu0 %v2032, 32
          %v2034 = vpop.permute.xlu0 %2033
          %v2036 = vunpack.c.l.b16 %v1988
          %v2037 = vpack.c.b16 %v2036, %v2036
          %2038 = vrot.lane.b32.xlu0 %v2037, 48
          %v2039 = vpop.permute.xlu0 %2038
          %v2041 = vunpack.c.l.b16 %v1953
          %v2042 = vpack.c.b16 %v2041, %v2041
          %2043 = vrot.lane.b32.xlu0 %v2042, 64
          %v2044 = vpop.permute.xlu0 %2043
          %v2046 = vunpack.c.l.b16 %v1987
          %v2047 = vpack.c.b16 %v2046, %v2046
          %2048 = vrot.lane.b32.xlu0 %v2047, 80
          %v2049 = vpop.permute.xlu0 %2048
          %v2051 = vunpack.c.l.b16 %v1955
          %v2052 = vpack.c.b16 %v2051, %v2051
          %2053 = vrot.lane.b32.xlu0 %v2052, 96
          %v2054 = vpop.permute.xlu0 %2053
          %v2056 = vunpack.c.l.b16 %v1989
          %v2057 = vpack.c.b16 %v2056, %v2056
          %2058 = vrot.lane.b32.xlu0 %v2057, 112
          %v2059 = vpop.permute.xlu0 %2058
          %v2062 = vsel %vm684, %v1878, %v1994
          %v2064 = vsel %vm688, %v2062, %v1999
          %v2066 = vsel %vm691, %v2064, %v2004
          %v2068 = vsel %vm694, %v2066, %v2009
          %v2070 = vsel %vm697, %v2068, %v2014
          %v2072 = vsel %vm700, %v2070, %v2019
          %v2074 = vsel %vm703, %v2072, %v2024
          %v2077 = vsel %vm684, %v1946, %v2029
          %v2079 = vsel %vm688, %v2077, %v2034
          %v2081 = vsel %vm691, %v2079, %v2039
          %v2083 = vsel %vm694, %v2081, %v2044
          %v2085 = vsel %vm697, %v2083, %v2049
          %v2087 = vsel %vm700, %v2085, %v2054
          %v2089 = vsel %vm703, %v2087, %v2059
          %v2092 = vunpack.c.l.b16 %v2074
          %v2093 = vunpack.c.l.b16 %v2089
          %v2094 = vpack.c.b16 %v2093, %v2092
          %2096 = vst [vmem:[#allocation3 + $0x10] sm:$0x33] %v2094
          %v2097 = vld [vmem:[#allocation2] sm:$0xf]
          %v2098 = vld [vmem:[#allocation2 + $0x4] sm:$0xf]
          %v2099 = vld [vmem:[#allocation2 + $0x8] sm:$0x1]
          %v2100 = vld [vmem:[#allocation2 + $0xc] sm:$0xf]
          %v2101 = vld [vmem:[#allocation2 + $0x10] sm:$0xf]
          %v2102 = vld [vmem:[#allocation2 + $0x14] sm:$0x1]
          %v2103 = vld [vmem:[#allocation2 + $0x18] sm:$0xf]
          %v2104 = vld [vmem:[#allocation2 + $0x1c] sm:$0xf]
          %v2105 = vld [vmem:[#allocation2 + $0x20] sm:$0x1]
          %v2106 = vld [vmem:[#allocation2 + $0x24] sm:$0xf]
          %v2107 = vld [vmem:[#allocation2 + $0x28] sm:$0xf]
          %v2108 = vld [vmem:[#allocation2 + $0x2c] sm:$0x1]
          %v2110 = vshrl.u32 %v2097, 16
          %v2112 = vrot.slane %v2110, 4
          %v2113 = vshll.u32 %v2097, 16
          %v2115 = vrot.slane %v2113, 5
          %v2116 = vor.u32 %v2112, %v2115
          %v2117 = vrot.slane %v2116, 4
          %v2119 = vshll.u32 %v2098, 16
          %v2121 = vrot.slane %v2119, 5
          %v2122 = vsel %vm1341, %v2117, %v2121
          %v2123 = vshrl.u32 %v2098, 16
          %v2125 = vrot.slane %v2123, 4
          %v2126 = vor.u32 %v2125, %v2121
          %v2127 = vrot.slane %v2126, 4
          %v2129 = vshll.u32 %v2099, 16
          %v2131 = vrot.slane %v2129, 5
          %v2132 = vsel %vm1341, %v2127, %v2131
          %v2134 = vshrl.u32 %v2100, 16
          %v2136 = vrot.slane %v2134, 4
          %v2137 = vshll.u32 %v2100, 16
          %v2139 = vrot.slane %v2137, 5
          %v2140 = vor.u32 %v2136, %v2139
          %v2141 = vrot.slane %v2140, 4
          %v2143 = vshll.u32 %v2101, 16
          %v2145 = vrot.slane %v2143, 5
          %v2146 = vsel %vm1341, %v2141, %v2145
          %v2147 = vshrl.u32 %v2101, 16
          %v2149 = vrot.slane %v2147, 4
          %v2150 = vor.u32 %v2149, %v2145
          %v2151 = vrot.slane %v2150, 4
          %v2153 = vshll.u32 %v2102, 16
          %v2155 = vrot.slane %v2153, 5
          %v2156 = vsel %vm1341, %v2151, %v2155
          %v2158 = vshrl.u32 %v2103, 16
          %v2160 = vrot.slane %v2158, 4
          %v2161 = vshll.u32 %v2103, 16
          %v2163 = vrot.slane %v2161, 5
          %v2164 = vor.u32 %v2160, %v2163
          %v2165 = vrot.slane %v2164, 4
          %v2167 = vshll.u32 %v2104, 16
          %v2169 = vrot.slane %v2167, 5
          %v2170 = vsel %vm1341, %v2165, %v2169
          %v2171 = vshrl.u32 %v2104, 16
          %v2173 = vrot.slane %v2171, 4
          %v2174 = vor.u32 %v2173, %v2169
          %v2175 = vrot.slane %v2174, 4
          %v2177 = vshll.u32 %v2105, 16
          %v2179 = vrot.slane %v2177, 5
          %v2180 = vsel %vm1341, %v2175, %v2179
          %v2182 = vshrl.u32 %v2106, 16
          %v2184 = vrot.slane %v2182, 4
          %v2185 = vshll.u32 %v2106, 16
          %v2187 = vrot.slane %v2185, 5
          %v2188 = vor.u32 %v2184, %v2187
          %v2189 = vrot.slane %v2188, 4
          %v2191 = vshll.u32 %v2107, 16
          %v2193 = vrot.slane %v2191, 5
          %v2194 = vsel %vm1341, %v2189, %v2193
          %v2195 = vshrl.u32 %v2107, 16
          %v2197 = vrot.slane %v2195, 4
          %v2198 = vor.u32 %v2197, %v2193
          %v2199 = vrot.slane %v2198, 4
          %v2201 = vshll.u32 %v2108, 16
          %v2203 = vrot.slane %v2201, 5
          %v2204 = vsel %vm1341, %v2199, %v2203
          %2205 = vrot.lane.b32.xlu0 %v2122, 126
          %v2206 = vpop.permute.xlu0 %2205
          %2207 = vrot.lane.b32.xlu0 %v2132, 126
          %v2208 = vpop.permute.xlu0 %2207
          %2209 = vrot.lane.b32.xlu0 %v2146, 126
          %v2210 = vpop.permute.xlu0 %2209
          %2211 = vrot.lane.b32.xlu0 %v2156, 126
          %v2212 = vpop.permute.xlu0 %2211
          %2213 = vrot.lane.b32.xlu0 %v2170, 126
          %v2214 = vpop.permute.xlu0 %2213
          %2215 = vrot.lane.b32.xlu0 %v2180, 126
          %v2216 = vpop.permute.xlu0 %2215
          %2217 = vrot.lane.b32.xlu0 %v2194, 126
          %v2218 = vpop.permute.xlu0 %2217
          %2219 = vrot.lane.b32.xlu0 %v2204, 126
          %v2220 = vpop.permute.xlu0 %2219
          %v2223 = vpack.i.b16 %v2210, %v2206
          %v2224 = vshrl.u32 %v2206, 16
          %v2225 = vshrl.u32 %v2210, 16
          %v2226 = vpack.i.b16 %v2225, %v2224
          %v2229 = vpack.i.b16 %v2218, %v2214
          %v2230 = vshrl.u32 %v2214, 16
          %v2231 = vshrl.u32 %v2218, 16
          %v2232 = vpack.i.b16 %v2231, %v2230
          %v2235 = vpack.i.b16 %v2212, %v2208
          %v2236 = vshrl.u32 %v2208, 16
          %v2237 = vshrl.u32 %v2212, 16
          %v2238 = vpack.i.b16 %v2237, %v2236
          %v2241 = vpack.i.b16 %v2220, %v2216
          %v2242 = vshrl.u32 %v2216, 16
          %v2243 = vshrl.u32 %v2220, 16
          %v2244 = vpack.i.b16 %v2243, %v2242
          %v2247 = vunpack.c.l.s4 1983009808
          %v2248 = vunpack.c.0.s8 %v2247
          %v2249 = vlaneseq
          %v2250 = vshrl.u32 %v2249, 7
          %v2251 = vsub.s32 %v2248, %v2250
          %v2252 = vrot.slane %v2223, %v2251
          %v2255 = vunpack.c.l.s4 1983009808
          %v2256 = vunpack.c.0.s8 %v2255
          %v2257 = vlaneseq
          %v2258 = vshrl.u32 %v2257, 7
          %v2259 = vsub.s32 %v2256, %v2258
          %v2260 = vrot.slane %v2229, %v2259
          %v2261 = vcombine.low %v2252, %v2260
          %v2262 = vcombine.high %v2252, %v2260
          %v2264 = vunpack.c.l.s4 1934713408
          %v2265 = vunpack.c.0.s8 %v2264
          %v2266 = vlaneseq
          %v2267 = vshrl.u32 %v2266, 7
          %v2268 = vsub.s32 %v2265, %v2267
          %v2269 = vrot.slane %v2261, %v2268
          %v2271 = vunpack.c.l.s4 1934713408
          %v2272 = vunpack.c.0.s8 %v2271
          %v2273 = vlaneseq
          %v2274 = vshrl.u32 %v2273, 7
          %v2275 = vsub.s32 %v2272, %v2274
          %v2276 = vrot.slane %v2262, %v2275
          %v2277 = vcombine.high %v2269, 0
          %v2278 = vcombine.high %v2276, 0
          %v2281 = vunpack.c.l.s4 1983009808
          %v2282 = vunpack.c.0.s8 %v2281
          %v2283 = vlaneseq
          %v2284 = vshrl.u32 %v2283, 7
          %v2285 = vsub.s32 %v2282, %v2284
          %v2286 = vrot.slane %v2226, %v2285
          %v2289 = vunpack.c.l.s4 1983009808
          %v2290 = vunpack.c.0.s8 %v2289
          %v2291 = vlaneseq
          %v2292 = vshrl.u32 %v2291, 7
          %v2293 = vsub.s32 %v2290, %v2292
          %v2294 = vrot.slane %v2232, %v2293
          %v2295 = vcombine.low %v2286, %v2294
          %v2296 = vcombine.high %v2286, %v2294
          %v2298 = vunpack.c.l.s4 1934713408
          %v2299 = vunpack.c.0.s8 %v2298
          %v2300 = vlaneseq
          %v2301 = vshrl.u32 %v2300, 7
          %v2302 = vsub.s32 %v2299, %v2301
          %v2303 = vrot.slane %v2295, %v2302
          %v2305 = vunpack.c.l.s4 1934713408
          %v2306 = vunpack.c.0.s8 %v2305
          %v2307 = vlaneseq
          %v2308 = vshrl.u32 %v2307, 7
          %v2309 = vsub.s32 %v2306, %v2308
          %v2310 = vrot.slane %v2296, %v2309
          %v2311 = vcombine.high %v2303, 0
          %v2312 = vcombine.high %v2310, 0
          %v2315 = vunpack.c.l.s4 1983009808
          %v2316 = vunpack.c.0.s8 %v2315
          %v2317 = vlaneseq
          %v2318 = vshrl.u32 %v2317, 7
          %v2319 = vsub.s32 %v2316, %v2318
          %v2320 = vrot.slane %v2235, %v2319
          %v2323 = vunpack.c.l.s4 1983009808
          %v2324 = vunpack.c.0.s8 %v2323
          %v2325 = vlaneseq
          %v2326 = vshrl.u32 %v2325, 7
          %v2327 = vsub.s32 %v2324, %v2326
          %v2328 = vrot.slane %v2241, %v2327
          %v2329 = vcombine.low %v2320, %v2328
          %v2330 = vcombine.high %v2320, %v2328
          %v2332 = vunpack.c.l.s4 1934713408
          %v2333 = vunpack.c.0.s8 %v2332
          %v2334 = vlaneseq
          %v2335 = vshrl.u32 %v2334, 7
          %v2336 = vsub.s32 %v2333, %v2335
          %v2337 = vrot.slane %v2329, %v2336
          %v2339 = vunpack.c.l.s4 1934713408
          %v2340 = vunpack.c.0.s8 %v2339
          %v2341 = vlaneseq
          %v2342 = vshrl.u32 %v2341, 7
          %v2343 = vsub.s32 %v2340, %v2342
          %v2344 = vrot.slane %v2330, %v2343
          %v2345 = vcombine.high %v2337, 0
          %v2346 = vcombine.high %v2344, 0
          %v2349 = vunpack.c.l.s4 1983009808
          %v2350 = vunpack.c.0.s8 %v2349
          %v2351 = vlaneseq
          %v2352 = vshrl.u32 %v2351, 7
          %v2353 = vsub.s32 %v2350, %v2352
          %v2354 = vrot.slane %v2238, %v2353
          %v2357 = vunpack.c.l.s4 1983009808
          %v2358 = vunpack.c.0.s8 %v2357
          %v2359 = vlaneseq
          %v2360 = vshrl.u32 %v2359, 7
          %v2361 = vsub.s32 %v2358, %v2360
          %v2362 = vrot.slane %v2244, %v2361
          %v2363 = vcombine.low %v2354, %v2362
          %v2364 = vcombine.high %v2354, %v2362
          %v2366 = vunpack.c.l.s4 1934713408
          %v2367 = vunpack.c.0.s8 %v2366
          %v2368 = vlaneseq
          %v2369 = vshrl.u32 %v2368, 7
          %v2370 = vsub.s32 %v2367, %v2369
          %v2371 = vrot.slane %v2363, %v2370
          %v2373 = vunpack.c.l.s4 1934713408
          %v2374 = vunpack.c.0.s8 %v2373
          %v2375 = vlaneseq
          %v2376 = vshrl.u32 %v2375, 7
          %v2377 = vsub.s32 %v2374, %v2376
          %v2378 = vrot.slane %v2364, %v2377
          %v2379 = vcombine.high %v2371, 0
          %v2380 = vcombine.high %v2378, 0
          %v2382 = vunpack.c.l.b16 %v2303
          %v2383 = vpack.c.b16 %v2382, %v2382
          %2384 = vrot.lane.b32.xlu0 %v2383, 16
          %v2385 = vpop.permute.xlu0 %2384
          %v2387 = vunpack.c.l.b16 %v2277
          %v2388 = vpack.c.b16 %v2387, %v2387
          %2389 = vrot.lane.b32.xlu0 %v2388, 32
          %v2390 = vpop.permute.xlu0 %2389
          %v2392 = vunpack.c.l.b16 %v2311
          %v2393 = vpack.c.b16 %v2392, %v2392
          %2394 = vrot.lane.b32.xlu0 %v2393, 48
          %v2395 = vpop.permute.xlu0 %2394
          %v2397 = vunpack.c.l.b16 %v2276
          %v2398 = vpack.c.b16 %v2397, %v2397
          %2399 = vrot.lane.b32.xlu0 %v2398, 64
          %v2400 = vpop.permute.xlu0 %2399
          %v2402 = vunpack.c.l.b16 %v2310
          %v2403 = vpack.c.b16 %v2402, %v2402
          %2404 = vrot.lane.b32.xlu0 %v2403, 80
          %v2405 = vpop.permute.xlu0 %2404
          %v2407 = vunpack.c.l.b16 %v2278
          %v2408 = vpack.c.b16 %v2407, %v2407
          %2409 = vrot.lane.b32.xlu0 %v2408, 96
          %v2410 = vpop.permute.xlu0 %2409
          %v2412 = vunpack.c.l.b16 %v2312
          %v2413 = vpack.c.b16 %v2412, %v2412
          %2414 = vrot.lane.b32.xlu0 %v2413, 112
          %v2415 = vpop.permute.xlu0 %2414
          %v2417 = vunpack.c.l.b16 %v2371
          %v2418 = vpack.c.b16 %v2417, %v2417
          %2419 = vrot.lane.b32.xlu0 %v2418, 16
          %v2420 = vpop.permute.xlu0 %2419
          %v2422 = vunpack.c.l.b16 %v2345
          %v2423 = vpack.c.b16 %v2422, %v2422
          %2424 = vrot.lane.b32.xlu0 %v2423, 32
          %v2425 = vpop.permute.xlu0 %2424
          %v2427 = vunpack.c.l.b16 %v2379
          %v2428 = vpack.c.b16 %v2427, %v2427
          %2429 = vrot.lane.b32.xlu0 %v2428, 48
          %v2430 = vpop.permute.xlu0 %2429
          %v2432 = vunpack.c.l.b16 %v2344
          %v2433 = vpack.c.b16 %v2432, %v2432
          %2434 = vrot.lane.b32.xlu0 %v2433, 64
          %v2435 = vpop.permute.xlu0 %2434
          %v2437 = vunpack.c.l.b16 %v2378
          %v2438 = vpack.c.b16 %v2437, %v2437
          %2439 = vrot.lane.b32.xlu0 %v2438, 80
          %v2440 = vpop.permute.xlu0 %2439
          %v2442 = vunpack.c.l.b16 %v2346
          %v2443 = vpack.c.b16 %v2442, %v2442
          %2444 = vrot.lane.b32.xlu0 %v2443, 96
          %v2445 = vpop.permute.xlu0 %2444
          %v2447 = vunpack.c.l.b16 %v2380
          %v2448 = vpack.c.b16 %v2447, %v2447
          %2449 = vrot.lane.b32.xlu0 %v2448, 112
          %v2450 = vpop.permute.xlu0 %2449
          %v2453 = vsel %vm684, %v2269, %v2385
          %v2455 = vsel %vm688, %v2453, %v2390
          %v2457 = vsel %vm691, %v2455, %v2395
          %v2459 = vsel %vm694, %v2457, %v2400
          %v2461 = vsel %vm697, %v2459, %v2405
          %v2463 = vsel %vm700, %v2461, %v2410
          %v2465 = vsel %vm703, %v2463, %v2415
          %v2468 = vsel %vm684, %v2337, %v2420
          %v2470 = vsel %vm688, %v2468, %v2425
          %v2472 = vsel %vm691, %v2470, %v2430
          %v2474 = vsel %vm694, %v2472, %v2435
          %v2476 = vsel %vm697, %v2474, %v2440
          %v2478 = vsel %vm700, %v2476, %v2445
          %v2480 = vsel %vm703, %v2478, %v2450
          %v2483 = vunpack.c.l.b16 %v2465
          %v2484 = vunpack.c.l.b16 %v2480
          %v2485 = vpack.c.b16 %v2484, %v2483
          %v2486 = vrot.slane %v2485, 6
          %2488 = vst [vmem:[#allocation3 + $0x10] sm:$0xcc] %v2486
          %v2489 = vld [vmem:[#allocation2] sm:$0xe]
          %v2490 = vld [vmem:[#allocation2 + $0x4] sm:$0xf]
          %v2491 = vld [vmem:[#allocation2 + $0x8] sm:$0x1]
          %v2492 = vld [vmem:[#allocation2 + $0xc] sm:$0xe]
          %v2493 = vld [vmem:[#allocation2 + $0x10] sm:$0xf]
          %v2494 = vld [vmem:[#allocation2 + $0x14] sm:$0x1]
          %v2495 = vld [vmem:[#allocation2 + $0x18] sm:$0xe]
          %v2496 = vld [vmem:[#allocation2 + $0x1c] sm:$0xf]
          %v2497 = vld [vmem:[#allocation2 + $0x20] sm:$0x1]
          %v2498 = vld [vmem:[#allocation2 + $0x24] sm:$0xe]
          %v2499 = vld [vmem:[#allocation2 + $0x28] sm:$0xf]
          %v2500 = vld [vmem:[#allocation2 + $0x2c] sm:$0x1]
          %vm2513 = vcmask 1042432
          %vm2514 = vcmask 1046532
          %vm2515 = vmor %vm2513, %vm2514
          %v2516 = vrot.slane %v2489, 5
          %v2517 = vrot.slane %v2516, 4
          %v2518 = vrot.slane %v2490, 5
          %v2519 = vsel %vm2515, %v2517, %v2518
          %v2520 = vrot.slane %v2518, 4
          %v2521 = vrot.slane %v2491, 5
          %v2522 = vsel %vm2515, %v2520, %v2521
          %v2523 = vrot.slane %v2492, 5
          %v2524 = vrot.slane %v2523, 4
          %v2525 = vrot.slane %v2493, 5
          %v2526 = vsel %vm2515, %v2524, %v2525
          %v2527 = vrot.slane %v2525, 4
          %v2528 = vrot.slane %v2494, 5
          %v2529 = vsel %vm2515, %v2527, %v2528
          %v2530 = vrot.slane %v2495, 5
          %v2531 = vrot.slane %v2530, 4
          %v2532 = vrot.slane %v2496, 5
          %v2533 = vsel %vm2515, %v2531, %v2532
          %v2534 = vrot.slane %v2532, 4
          %v2535 = vrot.slane %v2497, 5
          %v2536 = vsel %vm2515, %v2534, %v2535
          %v2537 = vrot.slane %v2498, 5
          %v2538 = vrot.slane %v2537, 4
          %v2539 = vrot.slane %v2499, 5
          %v2540 = vsel %vm2515, %v2538, %v2539
          %v2541 = vrot.slane %v2539, 4
          %v2542 = vrot.slane %v2500, 5
          %v2543 = vsel %vm2515, %v2541, %v2542
          %v2546 = vpack.i.b16 %v2526, %v2519
          %v2547 = vshrl.u32 %v2519, 16
          %v2548 = vshrl.u32 %v2526, 16
          %v2549 = vpack.i.b16 %v2548, %v2547
          %v2552 = vpack.i.b16 %v2540, %v2533
          %v2553 = vshrl.u32 %v2533, 16
          %v2554 = vshrl.u32 %v2540, 16
          %v2555 = vpack.i.b16 %v2554, %v2553
          %v2558 = vpack.i.b16 %v2529, %v2522
          %v2559 = vshrl.u32 %v2522, 16
          %v2560 = vshrl.u32 %v2529, 16
          %v2561 = vpack.i.b16 %v2560, %v2559
          %v2564 = vpack.i.b16 %v2543, %v2536
          %v2565 = vshrl.u32 %v2536, 16
          %v2566 = vshrl.u32 %v2543, 16
          %v2567 = vpack.i.b16 %v2566, %v2565
          %v2570 = vunpack.c.l.s4 1983009808
          %v2571 = vunpack.c.0.s8 %v2570
          %v2572 = vlaneseq
          %v2573 = vshrl.u32 %v2572, 7
          %v2574 = vsub.s32 %v2571, %v2573
          %v2575 = vrot.slane %v2546, %v2574
          %v2578 = vunpack.c.l.s4 1983009808
          %v2579 = vunpack.c.0.s8 %v2578
          %v2580 = vlaneseq
          %v2581 = vshrl.u32 %v2580, 7
          %v2582 = vsub.s32 %v2579, %v2581
          %v2583 = vrot.slane %v2552, %v2582
          %v2584 = vcombine.low %v2575, %v2583
          %v2585 = vcombine.high %v2575, %v2583
          %v2587 = vunpack.c.l.s4 1934713408
          %v2588 = vunpack.c.0.s8 %v2587
          %v2589 = vlaneseq
          %v2590 = vshrl.u32 %v2589, 7
          %v2591 = vsub.s32 %v2588, %v2590
          %v2592 = vrot.slane %v2584, %v2591
          %v2594 = vunpack.c.l.s4 1934713408
          %v2595 = vunpack.c.0.s8 %v2594
          %v2596 = vlaneseq
          %v2597 = vshrl.u32 %v2596, 7
          %v2598 = vsub.s32 %v2595, %v2597
          %v2599 = vrot.slane %v2585, %v2598
          %v2600 = vcombine.high %v2592, 0
          %v2601 = vcombine.high %v2599, 0
          %v2604 = vunpack.c.l.s4 1983009808
          %v2605 = vunpack.c.0.s8 %v2604
          %v2606 = vlaneseq
          %v2607 = vshrl.u32 %v2606, 7
          %v2608 = vsub.s32 %v2605, %v2607
          %v2609 = vrot.slane %v2549, %v2608
          %v2612 = vunpack.c.l.s4 1983009808
          %v2613 = vunpack.c.0.s8 %v2612
          %v2614 = vlaneseq
          %v2615 = vshrl.u32 %v2614, 7
          %v2616 = vsub.s32 %v2613, %v2615
          %v2617 = vrot.slane %v2555, %v2616
          %v2618 = vcombine.low %v2609, %v2617
          %v2619 = vcombine.high %v2609, %v2617
          %v2621 = vunpack.c.l.s4 1934713408
          %v2622 = vunpack.c.0.s8 %v2621
          %v2623 = vlaneseq
          %v2624 = vshrl.u32 %v2623, 7
          %v2625 = vsub.s32 %v2622, %v2624
          %v2626 = vrot.slane %v2618, %v2625
          %v2628 = vunpack.c.l.s4 1934713408
          %v2629 = vunpack.c.0.s8 %v2628
          %v2630 = vlaneseq
          %v2631 = vshrl.u32 %v2630, 7
          %v2632 = vsub.s32 %v2629, %v2631
          %v2633 = vrot.slane %v2619, %v2632
          %v2634 = vcombine.high %v2626, 0
          %v2635 = vcombine.high %v2633, 0
          %v2638 = vunpack.c.l.s4 1983009808
          %v2639 = vunpack.c.0.s8 %v2638
          %v2640 = vlaneseq
          %v2641 = vshrl.u32 %v2640, 7
          %v2642 = vsub.s32 %v2639, %v2641
          %v2643 = vrot.slane %v2558, %v2642
          %v2646 = vunpack.c.l.s4 1983009808
          %v2647 = vunpack.c.0.s8 %v2646
          %v2648 = vlaneseq
          %v2649 = vshrl.u32 %v2648, 7
          %v2650 = vsub.s32 %v2647, %v2649
          %v2651 = vrot.slane %v2564, %v2650
          %v2652 = vcombine.low %v2643, %v2651
          %v2653 = vcombine.high %v2643, %v2651
          %v2655 = vunpack.c.l.s4 1934713408
          %v2656 = vunpack.c.0.s8 %v2655
          %v2657 = vlaneseq
          %v2658 = vshrl.u32 %v2657, 7
          %v2659 = vsub.s32 %v2656, %v2658
          %v2660 = vrot.slane %v2652, %v2659
          %v2662 = vunpack.c.l.s4 1934713408
          %v2663 = vunpack.c.0.s8 %v2662
          %v2664 = vlaneseq
          %v2665 = vshrl.u32 %v2664, 7
          %v2666 = vsub.s32 %v2663, %v2665
          %v2667 = vrot.slane %v2653, %v2666
          %v2668 = vcombine.high %v2660, 0
          %v2669 = vcombine.high %v2667, 0
          %v2672 = vunpack.c.l.s4 1983009808
          %v2673 = vunpack.c.0.s8 %v2672
          %v2674 = vlaneseq
          %v2675 = vshrl.u32 %v2674, 7
          %v2676 = vsub.s32 %v2673, %v2675
          %v2677 = vrot.slane %v2561, %v2676
          %v2680 = vunpack.c.l.s4 1983009808
          %v2681 = vunpack.c.0.s8 %v2680
          %v2682 = vlaneseq
          %v2683 = vshrl.u32 %v2682, 7
          %v2684 = vsub.s32 %v2681, %v2683
          %v2685 = vrot.slane %v2567, %v2684
          %v2686 = vcombine.low %v2677, %v2685
          %v2687 = vcombine.high %v2677, %v2685
          %v2689 = vunpack.c.l.s4 1934713408
          %v2690 = vunpack.c.0.s8 %v2689
          %v2691 = vlaneseq
          %v2692 = vshrl.u32 %v2691, 7
          %v2693 = vsub.s32 %v2690, %v2692
          %v2694 = vrot.slane %v2686, %v2693
          %v2696 = vunpack.c.l.s4 1934713408
          %v2697 = vunpack.c.0.s8 %v2696
          %v2698 = vlaneseq
          %v2699 = vshrl.u32 %v2698, 7
          %v2700 = vsub.s32 %v2697, %v2699
          %v2701 = vrot.slane %v2687, %v2700
          %v2702 = vcombine.high %v2694, 0
          %v2703 = vcombine.high %v2701, 0
          %v2705 = vunpack.c.l.b16 %v2626
          %v2706 = vpack.c.b16 %v2705, %v2705
          %2707 = vrot.lane.b32.xlu0 %v2706, 16
          %v2708 = vpop.permute.xlu0 %2707
          %v2710 = vunpack.c.l.b16 %v2600
          %v2711 = vpack.c.b16 %v2710, %v2710
          %2712 = vrot.lane.b32.xlu0 %v2711, 32
          %v2713 = vpop.permute.xlu0 %2712
          %v2715 = vunpack.c.l.b16 %v2634
          %v2716 = vpack.c.b16 %v2715, %v2715
          %2717 = vrot.lane.b32.xlu0 %v2716, 48
          %v2718 = vpop.permute.xlu0 %2717
          %v2720 = vunpack.c.l.b16 %v2599
          %v2721 = vpack.c.b16 %v2720, %v2720
          %2722 = vrot.lane.b32.xlu0 %v2721, 64
          %v2723 = vpop.permute.xlu0 %2722
          %v2725 = vunpack.c.l.b16 %v2633
          %v2726 = vpack.c.b16 %v2725, %v2725
          %2727 = vrot.lane.b32.xlu0 %v2726, 80
          %v2728 = vpop.permute.xlu0 %2727
          %v2730 = vunpack.c.l.b16 %v2601
          %v2731 = vpack.c.b16 %v2730, %v2730
          %2732 = vrot.lane.b32.xlu0 %v2731, 96
          %v2733 = vpop.permute.xlu0 %2732
          %v2735 = vunpack.c.l.b16 %v2635
          %v2736 = vpack.c.b16 %v2735, %v2735
          %2737 = vrot.lane.b32.xlu0 %v2736, 112
          %v2738 = vpop.permute.xlu0 %2737
          %v2740 = vunpack.c.l.b16 %v2694
          %v2741 = vpack.c.b16 %v2740, %v2740
          %2742 = vrot.lane.b32.xlu0 %v2741, 16
          %v2743 = vpop.permute.xlu0 %2742
          %v2745 = vunpack.c.l.b16 %v2668
          %v2746 = vpack.c.b16 %v2745, %v2745
          %2747 = vrot.lane.b32.xlu0 %v2746, 32
          %v2748 = vpop.permute.xlu0 %2747
          %v2750 = vunpack.c.l.b16 %v2702
          %v2751 = vpack.c.b16 %v2750, %v2750
          %2752 = vrot.lane.b32.xlu0 %v2751, 48
          %v2753 = vpop.permute.xlu0 %2752
          %v2755 = vunpack.c.l.b16 %v2667
          %v2756 = vpack.c.b16 %v2755, %v2755
          %2757 = vrot.lane.b32.xlu0 %v2756, 64
          %v2758 = vpop.permute.xlu0 %2757
          %v2760 = vunpack.c.l.b16 %v2701
          %v2761 = vpack.c.b16 %v2760, %v2760
          %2762 = vrot.lane.b32.xlu0 %v2761, 80
          %v2763 = vpop.permute.xlu0 %2762
          %v2765 = vunpack.c.l.b16 %v2669
          %v2766 = vpack.c.b16 %v2765, %v2765
          %2767 = vrot.lane.b32.xlu0 %v2766, 96
          %v2768 = vpop.permute.xlu0 %2767
          %v2770 = vunpack.c.l.b16 %v2703
          %v2771 = vpack.c.b16 %v2770, %v2770
          %2772 = vrot.lane.b32.xlu0 %v2771, 112
          %v2773 = vpop.permute.xlu0 %2772
          %v2776 = vsel %vm684, %v2592, %v2708
          %v2778 = vsel %vm688, %v2776, %v2713
          %v2780 = vsel %vm691, %v2778, %v2718
          %v2782 = vsel %vm694, %v2780, %v2723
          %v2784 = vsel %vm697, %v2782, %v2728
          %v2786 = vsel %vm700, %v2784, %v2733
          %v2788 = vsel %vm703, %v2786, %v2738
          %v2791 = vsel %vm684, %v2660, %v2743
          %v2793 = vsel %vm688, %v2791, %v2748
          %v2795 = vsel %vm691, %v2793, %v2753
          %v2797 = vsel %vm694, %v2795, %v2758
          %v2799 = vsel %vm697, %v2797, %v2763
          %v2801 = vsel %vm700, %v2799, %v2768
          %v2803 = vsel %vm703, %v2801, %v2773
          %v2806 = vunpack.c.l.b16 %v2788
          %v2807 = vunpack.c.l.b16 %v2803
          %v2808 = vpack.c.b16 %v2807, %v2806
          %2810 = vst [vmem:[#allocation3 + $0x18] sm:$0x33] %v2808
          %v2811 = vld [vmem:[#allocation2] sm:$0xe]
          %v2812 = vld [vmem:[#allocation2 + $0x4] sm:$0xf]
          %v2813 = vld [vmem:[#allocation2 + $0x8] sm:$0x1]
          %v2814 = vld [vmem:[#allocation2 + $0xc] sm:$0xe]
          %v2815 = vld [vmem:[#allocation2 + $0x10] sm:$0xf]
          %v2816 = vld [vmem:[#allocation2 + $0x14] sm:$0x1]
          %v2817 = vld [vmem:[#allocation2 + $0x18] sm:$0xe]
          %v2818 = vld [vmem:[#allocation2 + $0x1c] sm:$0xf]
          %v2819 = vld [vmem:[#allocation2 + $0x20] sm:$0x1]
          %v2820 = vld [vmem:[#allocation2 + $0x24] sm:$0xe]
          %v2821 = vld [vmem:[#allocation2 + $0x28] sm:$0xf]
          %v2822 = vld [vmem:[#allocation2 + $0x2c] sm:$0x1]
          %v2835 = vrot.slane %v2811, 5
          %v2836 = vrot.slane %v2835, 4
          %v2837 = vrot.slane %v2812, 5
          %v2838 = vsel %vm2515, %v2836, %v2837
          %v2839 = vrot.slane %v2837, 4
          %v2840 = vrot.slane %v2813, 5
          %v2841 = vsel %vm2515, %v2839, %v2840
          %v2842 = vrot.slane %v2814, 5
          %v2843 = vrot.slane %v2842, 4
          %v2844 = vrot.slane %v2815, 5
          %v2845 = vsel %vm2515, %v2843, %v2844
          %v2846 = vrot.slane %v2844, 4
          %v2847 = vrot.slane %v2816, 5
          %v2848 = vsel %vm2515, %v2846, %v2847
          %v2849 = vrot.slane %v2817, 5
          %v2850 = vrot.slane %v2849, 4
          %v2851 = vrot.slane %v2818, 5
          %v2852 = vsel %vm2515, %v2850, %v2851
          %v2853 = vrot.slane %v2851, 4
          %v2854 = vrot.slane %v2819, 5
          %v2855 = vsel %vm2515, %v2853, %v2854
          %v2856 = vrot.slane %v2820, 5
          %v2857 = vrot.slane %v2856, 4
          %v2858 = vrot.slane %v2821, 5
          %v2859 = vsel %vm2515, %v2857, %v2858
          %v2860 = vrot.slane %v2858, 4
          %v2861 = vrot.slane %v2822, 5
          %v2862 = vsel %vm2515, %v2860, %v2861
          %2863 = vrot.lane.b32.xlu0 %v2838, 127
          %v2864 = vpop.permute.xlu0 %2863
          %2865 = vrot.lane.b32.xlu0 %v2841, 127
          %v2866 = vpop.permute.xlu0 %2865
          %2867 = vrot.lane.b32.xlu0 %v2845, 127
          %v2868 = vpop.permute.xlu0 %2867
          %2869 = vrot.lane.b32.xlu0 %v2848, 127
          %v2870 = vpop.permute.xlu0 %2869
          %2871 = vrot.lane.b32.xlu0 %v2852, 127
          %v2872 = vpop.permute.xlu0 %2871
          %2873 = vrot.lane.b32.xlu0 %v2855, 127
          %v2874 = vpop.permute.xlu0 %2873
          %2875 = vrot.lane.b32.xlu0 %v2859, 127
          %v2876 = vpop.permute.xlu0 %2875
          %2877 = vrot.lane.b32.xlu0 %v2862, 127
          %v2878 = vpop.permute.xlu0 %2877
          %v2881 = vpack.i.b16 %v2868, %v2864
          %v2882 = vshrl.u32 %v2864, 16
          %v2883 = vshrl.u32 %v2868, 16
          %v2884 = vpack.i.b16 %v2883, %v2882
          %v2887 = vpack.i.b16 %v2876, %v2872
          %v2888 = vshrl.u32 %v2872, 16
          %v2889 = vshrl.u32 %v2876, 16
          %v2890 = vpack.i.b16 %v2889, %v2888
          %v2893 = vpack.i.b16 %v2870, %v2866
          %v2894 = vshrl.u32 %v2866, 16
          %v2895 = vshrl.u32 %v2870, 16
          %v2896 = vpack.i.b16 %v2895, %v2894
          %v2899 = vpack.i.b16 %v2878, %v2874
          %v2900 = vshrl.u32 %v2874, 16
          %v2901 = vshrl.u32 %v2878, 16
          %v2902 = vpack.i.b16 %v2901, %v2900
          %v2905 = vunpack.c.l.s4 1983009808
          %v2906 = vunpack.c.0.s8 %v2905
          %v2907 = vlaneseq
          %v2908 = vshrl.u32 %v2907, 7
          %v2909 = vsub.s32 %v2906, %v2908
          %v2910 = vrot.slane %v2881, %v2909
          %v2913 = vunpack.c.l.s4 1983009808
          %v2914 = vunpack.c.0.s8 %v2913
          %v2915 = vlaneseq
          %v2916 = vshrl.u32 %v2915, 7
          %v2917 = vsub.s32 %v2914, %v2916
          %v2918 = vrot.slane %v2887, %v2917
          %v2919 = vcombine.low %v2910, %v2918
          %v2920 = vcombine.high %v2910, %v2918
          %v2922 = vunpack.c.l.s4 1934713408
          %v2923 = vunpack.c.0.s8 %v2922
          %v2924 = vlaneseq
          %v2925 = vshrl.u32 %v2924, 7
          %v2926 = vsub.s32 %v2923, %v2925
          %v2927 = vrot.slane %v2919, %v2926
          %v2929 = vunpack.c.l.s4 1934713408
          %v2930 = vunpack.c.0.s8 %v2929
          %v2931 = vlaneseq
          %v2932 = vshrl.u32 %v2931, 7
          %v2933 = vsub.s32 %v2930, %v2932
          %v2934 = vrot.slane %v2920, %v2933
          %v2935 = vcombine.high %v2927, 0
          %v2936 = vcombine.high %v2934, 0
          %v2939 = vunpack.c.l.s4 1983009808
          %v2940 = vunpack.c.0.s8 %v2939
          %v2941 = vlaneseq
          %v2942 = vshrl.u32 %v2941, 7
          %v2943 = vsub.s32 %v2940, %v2942
          %v2944 = vrot.slane %v2884, %v2943
          %v2947 = vunpack.c.l.s4 1983009808
          %v2948 = vunpack.c.0.s8 %v2947
          %v2949 = vlaneseq
          %v2950 = vshrl.u32 %v2949, 7
          %v2951 = vsub.s32 %v2948, %v2950
          %v2952 = vrot.slane %v2890, %v2951
          %v2953 = vcombine.low %v2944, %v2952
          %v2954 = vcombine.high %v2944, %v2952
          %v2956 = vunpack.c.l.s4 1934713408
          %v2957 = vunpack.c.0.s8 %v2956
          %v2958 = vlaneseq
          %v2959 = vshrl.u32 %v2958, 7
          %v2960 = vsub.s32 %v2957, %v2959
          %v2961 = vrot.slane %v2953, %v2960
          %v2963 = vunpack.c.l.s4 1934713408
          %v2964 = vunpack.c.0.s8 %v2963
          %v2965 = vlaneseq
          %v2966 = vshrl.u32 %v2965, 7
          %v2967 = vsub.s32 %v2964, %v2966
          %v2968 = vrot.slane %v2954, %v2967
          %v2969 = vcombine.high %v2961, 0
          %v2970 = vcombine.high %v2968, 0
          %v2973 = vunpack.c.l.s4 1983009808
          %v2974 = vunpack.c.0.s8 %v2973
          %v2975 = vlaneseq
          %v2976 = vshrl.u32 %v2975, 7
          %v2977 = vsub.s32 %v2974, %v2976
          %v2978 = vrot.slane %v2893, %v2977
          %v2981 = vunpack.c.l.s4 1983009808
          %v2982 = vunpack.c.0.s8 %v2981
          %v2983 = vlaneseq
          %v2984 = vshrl.u32 %v2983, 7
          %v2985 = vsub.s32 %v2982, %v2984
          %v2986 = vrot.slane %v2899, %v2985
          %v2987 = vcombine.low %v2978, %v2986
          %v2988 = vcombine.high %v2978, %v2986
          %v2990 = vunpack.c.l.s4 1934713408
          %v2991 = vunpack.c.0.s8 %v2990
          %v2992 = vlaneseq
          %v2993 = vshrl.u32 %v2992, 7
          %v2994 = vsub.s32 %v2991, %v2993
          %v2995 = vrot.slane %v2987, %v2994
          %v2997 = vunpack.c.l.s4 1934713408
          %v2998 = vunpack.c.0.s8 %v2997
          %v2999 = vlaneseq
          %v3000 = vshrl.u32 %v2999, 7
          %v3001 = vsub.s32 %v2998, %v3000
          %v3002 = vrot.slane %v2988, %v3001
          %v3003 = vcombine.high %v2995, 0
          %v3004 = vcombine.high %v3002, 0
          %v3007 = vunpack.c.l.s4 1983009808
          %v3008 = vunpack.c.0.s8 %v3007
          %v3009 = vlaneseq
          %v3010 = vshrl.u32 %v3009, 7
          %v3011 = vsub.s32 %v3008, %v3010
          %v3012 = vrot.slane %v2896, %v3011
          %v3015 = vunpack.c.l.s4 1983009808
          %v3016 = vunpack.c.0.s8 %v3015
          %v3017 = vlaneseq
          %v3018 = vshrl.u32 %v3017, 7
          %v3019 = vsub.s32 %v3016, %v3018
          %v3020 = vrot.slane %v2902, %v3019
          %v3021 = vcombine.low %v3012, %v3020
          %v3022 = vcombine.high %v3012, %v3020
          %v3024 = vunpack.c.l.s4 1934713408
          %v3025 = vunpack.c.0.s8 %v3024
          %v3026 = vlaneseq
          %v3027 = vshrl.u32 %v3026, 7
          %v3028 = vsub.s32 %v3025, %v3027
          %v3029 = vrot.slane %v3021, %v3028
          %v3031 = vunpack.c.l.s4 1934713408
          %v3032 = vunpack.c.0.s8 %v3031
          %v3033 = vlaneseq
          %v3034 = vshrl.u32 %v3033, 7
          %v3035 = vsub.s32 %v3032, %v3034
          %v3036 = vrot.slane %v3022, %v3035
          %v3037 = vcombine.high %v3029, 0
          %v3038 = vcombine.high %v3036, 0
          %v3040 = vunpack.c.l.b16 %v2961
          %v3041 = vpack.c.b16 %v3040, %v3040
          %3042 = vrot.lane.b32.xlu0 %v3041, 16
          %v3043 = vpop.permute.xlu0 %3042
          %v3045 = vunpack.c.l.b16 %v2935
          %v3046 = vpack.c.b16 %v3045, %v3045
          %3047 = vrot.lane.b32.xlu0 %v3046, 32
          %v3048 = vpop.permute.xlu0 %3047
          %v3050 = vunpack.c.l.b16 %v2969
          %v3051 = vpack.c.b16 %v3050, %v3050
          %3052 = vrot.lane.b32.xlu0 %v3051, 48
          %v3053 = vpop.permute.xlu0 %3052
          %v3055 = vunpack.c.l.b16 %v2934
          %v3056 = vpack.c.b16 %v3055, %v3055
          %3057 = vrot.lane.b32.xlu0 %v3056, 64
          %v3058 = vpop.permute.xlu0 %3057
          %v3060 = vunpack.c.l.b16 %v2968
          %v3061 = vpack.c.b16 %v3060, %v3060
          %3062 = vrot.lane.b32.xlu0 %v3061, 80
          %v3063 = vpop.permute.xlu0 %3062
          %v3065 = vunpack.c.l.b16 %v2936
          %v3066 = vpack.c.b16 %v3065, %v3065
          %3067 = vrot.lane.b32.xlu0 %v3066, 96
          %v3068 = vpop.permute.xlu0 %3067
          %v3070 = vunpack.c.l.b16 %v2970
          %v3071 = vpack.c.b16 %v3070, %v3070
          %3072 = vrot.lane.b32.xlu0 %v3071, 112
          %v3073 = vpop.permute.xlu0 %3072
          %v3075 = vunpack.c.l.b16 %v3029
          %v3076 = vpack.c.b16 %v3075, %v3075
          %3077 = vrot.lane.b32.xlu0 %v3076, 16
          %v3078 = vpop.permute.xlu0 %3077
          %v3080 = vunpack.c.l.b16 %v3003
          %v3081 = vpack.c.b16 %v3080, %v3080
          %3082 = vrot.lane.b32.xlu0 %v3081, 32
          %v3083 = vpop.permute.xlu0 %3082
          %v3085 = vunpack.c.l.b16 %v3037
          %v3086 = vpack.c.b16 %v3085, %v3085
          %3087 = vrot.lane.b32.xlu0 %v3086, 48
          %v3088 = vpop.permute.xlu0 %3087
          %v3090 = vunpack.c.l.b16 %v3002
          %v3091 = vpack.c.b16 %v3090, %v3090
          %3092 = vrot.lane.b32.xlu0 %v3091, 64
          %v3093 = vpop.permute.xlu0 %3092
          %v3095 = vunpack.c.l.b16 %v3036
          %v3096 = vpack.c.b16 %v3095, %v3095
          %3097 = vrot.lane.b32.xlu0 %v3096, 80
          %v3098 = vpop.permute.xlu0 %3097
          %v3100 = vunpack.c.l.b16 %v3004
          %v3101 = vpack.c.b16 %v3100, %v3100
          %3102 = vrot.lane.b32.xlu0 %v3101, 96
          %v3103 = vpop.permute.xlu0 %3102
          %v3105 = vunpack.c.l.b16 %v3038
          %v3106 = vpack.c.b16 %v3105, %v3105
          %3107 = vrot.lane.b32.xlu0 %v3106, 112
          %v3108 = vpop.permute.xlu0 %3107
          %v3111 = vsel %vm684, %v2927, %v3043
          %v3113 = vsel %vm688, %v3111, %v3048
          %v3115 = vsel %vm691, %v3113, %v3053
          %v3117 = vsel %vm694, %v3115, %v3058
          %v3119 = vsel %vm697, %v3117, %v3063
          %v3121 = vsel %vm700, %v3119, %v3068
          %v3123 = vsel %vm703, %v3121, %v3073
          %v3126 = vsel %vm684, %v2995, %v3078
          %v3128 = vsel %vm688, %v3126, %v3083
          %v3130 = vsel %vm691, %v3128, %v3088
          %v3132 = vsel %vm694, %v3130, %v3093
          %v3134 = vsel %vm697, %v3132, %v3098
          %v3136 = vsel %vm700, %v3134, %v3103
          %v3138 = vsel %vm703, %v3136, %v3108
          %v3141 = vunpack.c.l.b16 %v3123
          %v3142 = vunpack.c.l.b16 %v3138
          %v3143 = vpack.c.b16 %v3142, %v3141
          %v3144 = vrot.slane %v3143, 6
          %3146 = vst [vmem:[#allocation3 + $0x18] sm:$0xcc] %v3144
          %v3147 = vld [vmem:[#allocation2] sm:$0xe]
          %v3148 = vld [vmem:[#allocation2 + $0x4] sm:$0xf]
          %v3149 = vld [vmem:[#allocation2 + $0x8] sm:$0x1]
          %v3150 = vld [vmem:[#allocation2 + $0xc] sm:$0xe]
          %v3151 = vld [vmem:[#allocation2 + $0x10] sm:$0xf]
          %v3152 = vld [vmem:[#allocation2 + $0x14] sm:$0x1]
          %v3153 = vld [vmem:[#allocation2 + $0x18] sm:$0xe]
          %v3154 = vld [vmem:[#allocation2 + $0x1c] sm:$0xf]
          %v3155 = vld [vmem:[#allocation2 + $0x20] sm:$0x1]
          %v3156 = vld [vmem:[#allocation2 + $0x24] sm:$0xe]
          %v3157 = vld [vmem:[#allocation2 + $0x28] sm:$0xf]
          %v3158 = vld [vmem:[#allocation2 + $0x2c] sm:$0x1]
          %v3171 = vrot.slane %v3147, 5
          %v3172 = vrot.slane %v3171, 4
          %v3173 = vrot.slane %v3148, 5
          %v3174 = vsel %vm2515, %v3172, %v3173
          %v3175 = vrot.slane %v3173, 4
          %v3176 = vrot.slane %v3149, 5
          %v3177 = vsel %vm2515, %v3175, %v3176
          %v3178 = vrot.slane %v3150, 5
          %v3179 = vrot.slane %v3178, 4
          %v3180 = vrot.slane %v3151, 5
          %v3181 = vsel %vm2515, %v3179, %v3180
          %v3182 = vrot.slane %v3180, 4
          %v3183 = vrot.slane %v3152, 5
          %v3184 = vsel %vm2515, %v3182, %v3183
          %v3185 = vrot.slane %v3153, 5
          %v3186 = vrot.slane %v3185, 4
          %v3187 = vrot.slane %v3154, 5
          %v3188 = vsel %vm2515, %v3186, %v3187
          %v3189 = vrot.slane %v3187, 4
          %v3190 = vrot.slane %v3155, 5
          %v3191 = vsel %vm2515, %v3189, %v3190
          %v3192 = vrot.slane %v3156, 5
          %v3193 = vrot.slane %v3192, 4
          %v3194 = vrot.slane %v3157, 5
          %v3195 = vsel %vm2515, %v3193, %v3194
          %v3196 = vrot.slane %v3194, 4
          %v3197 = vrot.slane %v3158, 5
          %v3198 = vsel %vm2515, %v3196, %v3197
          %3199 = vrot.lane.b32.xlu0 %v3174, 126
          %v3200 = vpop.permute.xlu0 %3199
          %3201 = vrot.lane.b32.xlu0 %v3177, 126
          %v3202 = vpop.permute.xlu0 %3201
          %3203 = vrot.lane.b32.xlu0 %v3181, 126
          %v3204 = vpop.permute.xlu0 %3203
          %3205 = vrot.lane.b32.xlu0 %v3184, 126
          %v3206 = vpop.permute.xlu0 %3205
          %3207 = vrot.lane.b32.xlu0 %v3188, 126
          %v3208 = vpop.permute.xlu0 %3207
          %3209 = vrot.lane.b32.xlu0 %v3191, 126
          %v3210 = vpop.permute.xlu0 %3209
          %3211 = vrot.lane.b32.xlu0 %v3195, 126
          %v3212 = vpop.permute.xlu0 %3211
          %3213 = vrot.lane.b32.xlu0 %v3198, 126
          %v3214 = vpop.permute.xlu0 %3213
          %v3217 = vpack.i.b16 %v3204, %v3200
          %v3218 = vshrl.u32 %v3200, 16
          %v3219 = vshrl.u32 %v3204, 16
          %v3220 = vpack.i.b16 %v3219, %v3218
          %v3223 = vpack.i.b16 %v3212, %v3208
          %v3224 = vshrl.u32 %v3208, 16
          %v3225 = vshrl.u32 %v3212, 16
          %v3226 = vpack.i.b16 %v3225, %v3224
          %v3229 = vpack.i.b16 %v3206, %v3202
          %v3230 = vshrl.u32 %v3202, 16
          %v3231 = vshrl.u32 %v3206, 16
          %v3232 = vpack.i.b16 %v3231, %v3230
          %v3235 = vpack.i.b16 %v3214, %v3210
          %v3236 = vshrl.u32 %v3210, 16
          %v3237 = vshrl.u32 %v3214, 16
          %v3238 = vpack.i.b16 %v3237, %v3236
          %v3241 = vunpack.c.l.s4 1983009808
          %v3242 = vunpack.c.0.s8 %v3241
          %v3243 = vlaneseq
          %v3244 = vshrl.u32 %v3243, 7
          %v3245 = vsub.s32 %v3242, %v3244
          %v3246 = vrot.slane %v3217, %v3245
          %v3249 = vunpack.c.l.s4 1983009808
          %v3250 = vunpack.c.0.s8 %v3249
          %v3251 = vlaneseq
          %v3252 = vshrl.u32 %v3251, 7
          %v3253 = vsub.s32 %v3250, %v3252
          %v3254 = vrot.slane %v3223, %v3253
          %v3255 = vcombine.low %v3246, %v3254
          %v3256 = vcombine.high %v3246, %v3254
          %v3258 = vunpack.c.l.s4 1934713408
          %v3259 = vunpack.c.0.s8 %v3258
          %v3260 = vlaneseq
          %v3261 = vshrl.u32 %v3260, 7
          %v3262 = vsub.s32 %v3259, %v3261
          %v3263 = vrot.slane %v3255, %v3262
          %v3265 = vunpack.c.l.s4 1934713408
          %v3266 = vunpack.c.0.s8 %v3265
          %v3267 = vlaneseq
          %v3268 = vshrl.u32 %v3267, 7
          %v3269 = vsub.s32 %v3266, %v3268
          %v3270 = vrot.slane %v3256, %v3269
          %v3271 = vcombine.high %v3263, 0
          %v3272 = vcombine.high %v3270, 0
          %v3275 = vunpack.c.l.s4 1983009808
          %v3276 = vunpack.c.0.s8 %v3275
          %v3277 = vlaneseq
          %v3278 = vshrl.u32 %v3277, 7
          %v3279 = vsub.s32 %v3276, %v3278
          %v3280 = vrot.slane %v3220, %v3279
          %v3283 = vunpack.c.l.s4 1983009808
          %v3284 = vunpack.c.0.s8 %v3283
          %v3285 = vlaneseq
          %v3286 = vshrl.u32 %v3285, 7
          %v3287 = vsub.s32 %v3284, %v3286
          %v3288 = vrot.slane %v3226, %v3287
          %v3289 = vcombine.low %v3280, %v3288
          %v3290 = vcombine.high %v3280, %v3288
          %v3292 = vunpack.c.l.s4 1934713408
          %v3293 = vunpack.c.0.s8 %v3292
          %v3294 = vlaneseq
          %v3295 = vshrl.u32 %v3294, 7
          %v3296 = vsub.s32 %v3293, %v3295
          %v3297 = vrot.slane %v3289, %v3296
          %v3299 = vunpack.c.l.s4 1934713408
          %v3300 = vunpack.c.0.s8 %v3299
          %v3301 = vlaneseq
          %v3302 = vshrl.u32 %v3301, 7
          %v3303 = vsub.s32 %v3300, %v3302
          %v3304 = vrot.slane %v3290, %v3303
          %v3305 = vcombine.high %v3297, 0
          %v3306 = vcombine.high %v3304, 0
          %v3309 = vunpack.c.l.s4 1983009808
          %v3310 = vunpack.c.0.s8 %v3309
          %v3311 = vlaneseq
          %v3312 = vshrl.u32 %v3311, 7
          %v3313 = vsub.s32 %v3310, %v3312
          %v3314 = vrot.slane %v3229, %v3313
          %v3317 = vunpack.c.l.s4 1983009808
          %v3318 = vunpack.c.0.s8 %v3317
          %v3319 = vlaneseq
          %v3320 = vshrl.u32 %v3319, 7
          %v3321 = vsub.s32 %v3318, %v3320
          %v3322 = vrot.slane %v3235, %v3321
          %v3323 = vcombine.low %v3314, %v3322
          %v3324 = vcombine.high %v3314, %v3322
          %v3326 = vunpack.c.l.s4 1934713408
          %v3327 = vunpack.c.0.s8 %v3326
          %v3328 = vlaneseq
          %v3329 = vshrl.u32 %v3328, 7
          %v3330 = vsub.s32 %v3327, %v3329
          %v3331 = vrot.slane %v3323, %v3330
          %v3333 = vunpack.c.l.s4 1934713408
          %v3334 = vunpack.c.0.s8 %v3333
          %v3335 = vlaneseq
          %v3336 = vshrl.u32 %v3335, 7
          %v3337 = vsub.s32 %v3334, %v3336
          %v3338 = vrot.slane %v3324, %v3337
          %v3339 = vcombine.high %v3331, 0
          %v3340 = vcombine.high %v3338, 0
          %v3343 = vunpack.c.l.s4 1983009808
          %v3344 = vunpack.c.0.s8 %v3343
          %v3345 = vlaneseq
          %v3346 = vshrl.u32 %v3345, 7
          %v3347 = vsub.s32 %v3344, %v3346
          %v3348 = vrot.slane %v3232, %v3347
          %v3351 = vunpack.c.l.s4 1983009808
          %v3352 = vunpack.c.0.s8 %v3351
          %v3353 = vlaneseq
          %v3354 = vshrl.u32 %v3353, 7
          %v3355 = vsub.s32 %v3352, %v3354
          %v3356 = vrot.slane %v3238, %v3355
          %v3357 = vcombine.low %v3348, %v3356
          %v3358 = vcombine.high %v3348, %v3356
          %v3360 = vunpack.c.l.s4 1934713408
          %v3361 = vunpack.c.0.s8 %v3360
          %v3362 = vlaneseq
          %v3363 = vshrl.u32 %v3362, 7
          %v3364 = vsub.s32 %v3361, %v3363
          %v3365 = vrot.slane %v3357, %v3364
          %v3367 = vunpack.c.l.s4 1934713408
          %v3368 = vunpack.c.0.s8 %v3367
          %v3369 = vlaneseq
          %v3370 = vshrl.u32 %v3369, 7
          %v3371 = vsub.s32 %v3368, %v3370
          %v3372 = vrot.slane %v3358, %v3371
          %v3373 = vcombine.high %v3365, 0
          %v3374 = vcombine.high %v3372, 0
          %v3376 = vunpack.c.l.b16 %v3297
          %v3377 = vpack.c.b16 %v3376, %v3376
          %3378 = vrot.lane.b32.xlu0 %v3377, 16
          %v3379 = vpop.permute.xlu0 %3378
          %v3381 = vunpack.c.l.b16 %v3271
          %v3382 = vpack.c.b16 %v3381, %v3381
          %3383 = vrot.lane.b32.xlu0 %v3382, 32
          %v3384 = vpop.permute.xlu0 %3383
          %v3386 = vunpack.c.l.b16 %v3305
          %v3387 = vpack.c.b16 %v3386, %v3386
          %3388 = vrot.lane.b32.xlu0 %v3387, 48
          %v3389 = vpop.permute.xlu0 %3388
          %v3391 = vunpack.c.l.b16 %v3270
          %v3392 = vpack.c.b16 %v3391, %v3391
          %3393 = vrot.lane.b32.xlu0 %v3392, 64
          %v3394 = vpop.permute.xlu0 %3393
          %v3396 = vunpack.c.l.b16 %v3304
          %v3397 = vpack.c.b16 %v3396, %v3396
          %3398 = vrot.lane.b32.xlu0 %v3397, 80
          %v3399 = vpop.permute.xlu0 %3398
          %v3401 = vunpack.c.l.b16 %v3272
          %v3402 = vpack.c.b16 %v3401, %v3401
          %3403 = vrot.lane.b32.xlu0 %v3402, 96
          %v3404 = vpop.permute.xlu0 %3403
          %v3406 = vunpack.c.l.b16 %v3306
          %v3407 = vpack.c.b16 %v3406, %v3406
          %3408 = vrot.lane.b32.xlu0 %v3407, 112
          %v3409 = vpop.permute.xlu0 %3408
          %v3411 = vunpack.c.l.b16 %v3365
          %v3412 = vpack.c.b16 %v3411, %v3411
          %3413 = vrot.lane.b32.xlu0 %v3412, 16
          %v3414 = vpop.permute.xlu0 %3413
          %v3416 = vunpack.c.l.b16 %v3339
          %v3417 = vpack.c.b16 %v3416, %v3416
          %3418 = vrot.lane.b32.xlu0 %v3417, 32
          %v3419 = vpop.permute.xlu0 %3418
          %v3421 = vunpack.c.l.b16 %v3373
          %v3422 = vpack.c.b16 %v3421, %v3421
          %3423 = vrot.lane.b32.xlu0 %v3422, 48
          %v3424 = vpop.permute.xlu0 %3423
          %v3426 = vunpack.c.l.b16 %v3338
          %v3427 = vpack.c.b16 %v3426, %v3426
          %3428 = vrot.lane.b32.xlu0 %v3427, 64
          %v3429 = vpop.permute.xlu0 %3428
          %v3431 = vunpack.c.l.b16 %v3372
          %v3432 = vpack.c.b16 %v3431, %v3431
          %3433 = vrot.lane.b32.xlu0 %v3432, 80
          %v3434 = vpop.permute.xlu0 %3433
          %v3436 = vunpack.c.l.b16 %v3340
          %v3437 = vpack.c.b16 %v3436, %v3436
          %3438 = vrot.lane.b32.xlu0 %v3437, 96
          %v3439 = vpop.permute.xlu0 %3438
          %v3441 = vunpack.c.l.b16 %v3374
          %v3442 = vpack.c.b16 %v3441, %v3441
          %3443 = vrot.lane.b32.xlu0 %v3442, 112
          %v3444 = vpop.permute.xlu0 %3443
          %v3447 = vsel %vm684, %v3263, %v3379
          %v3449 = vsel %vm688, %v3447, %v3384
          %v3451 = vsel %vm691, %v3449, %v3389
          %v3453 = vsel %vm694, %v3451, %v3394
          %v3455 = vsel %vm697, %v3453, %v3399
          %v3457 = vsel %vm700, %v3455, %v3404
          %v3459 = vsel %vm703, %v3457, %v3409
          %v3462 = vsel %vm684, %v3331, %v3414
          %v3464 = vsel %vm688, %v3462, %v3419
          %v3466 = vsel %vm691, %v3464, %v3424
          %v3468 = vsel %vm694, %v3466, %v3429
          %v3470 = vsel %vm697, %v3468, %v3434
          %v3472 = vsel %vm700, %v3470, %v3439
          %v3474 = vsel %vm703, %v3472, %v3444
          %v3477 = vunpack.c.l.b16 %v3459
          %v3478 = vunpack.c.l.b16 %v3474
          %v3479 = vpack.c.b16 %v3478, %v3477
          %3481 = vst [vmem:[#allocation3 + $0x20] sm:$0x33] %v3479
        $region40: #{tpu_custom_call.1} parent=31 // pred_fallthru
          _
        %v3482 = vld [vmem:[%s232] sm:$0xf]
        %v3483 = vld [vmem:[#allocation3] sm:$0xff]
        %v3484 = vld [vmem:[#allocation3 + $0x8] sm:$0xff]
        %v3485 = vld [vmem:[#allocation3 + $0x10] sm:$0xff]
        %v3486 = vld [vmem:[#allocation3 + $0x18] sm:$0xff]
        %v3487 = vld [vmem:[#allocation3 + $0x20] sm:$0x33]
        %v3488 = vld [vmem:[%s236] sm:$0xff]
        %3490 = vset.pattern.permute.xlu0 0
        %3491 = vperm.xlu0 %3490, %v3488
        %v3492 = vpop.permute.xlu0 %3491
        %v3499 = vunpack.c.l.b16 %v3483
        %v3500 = vunpack.c.h.b16 %v3483
        %v3501 = vunpack.c.l.b16 %v3484
        %v3502 = vunpack.c.h.b16 %v3484
        %v3503 = vunpack.c.l.b16 %v3485
        %v3504 = vunpack.c.h.b16 %v3485
        %v3505 = vunpack.c.l.b16 %v3486
        %v3506 = vunpack.c.h.b16 %v3486
        %v3507 = vunpack.c.l.b16 %v3487
        %v3508 = vunpack.c.h.b16 %v3487
        %v3509 = vpack.c.b16 %v3501, %v3499
        %v3510 = vpack.c.b16 %v3502, %v3500
        %v3511 = vpack.c.b16 %v3505, %v3503
        %v3512 = vpack.c.b16 %v3506, %v3504
        %v3513 = vpack.c.b16 %v3507, %v3507
        %v3514 = vpack.c.b16 %v3508, %v3508
        %vm3519 = vcmask 293888
        %v3521 = vsel %vm3519, %v3482, 0
        %vm3523 = vcmask 1041408
        %v3525 = vsel %vm3523, %v3513, 0
        %v3528 = vsel %vm3523, %v3514, 0
        %3530 = vmatprep.subr.bf16.mxu0 0
        %3531 = vmatpush1.bf16.msra.mxu0 0
        %3532 = vmatprep.subr.bf16.mxu0 0
        %3533 = vmatpush1.bf16.msra.mxu0 0
        %3534 = vmatprep.subr.bf16.mxu0 0
        %3535 = vmatpush1.bf16.msra.mxu0 0
        %3536 = vmatprep.subr.bf16.mxu0 0
        %3537 = vmatpush1.bf16.msra.mxu0 0
        %3538 = vmatprep.subr.bf16.mxu0 0
        %3539 = vmatpush1.bf16.msra.mxu0 0
        %3540 = vmatprep.subr.bf16.mxu0 %v3528
        %3541 = vmatpush1.bf16.msra.mxu0 %v3525
        %3542 = vmatprep.subr.bf16.mxu0 %v3512
        %3543 = vmatpush1.bf16.msra.mxu0 %v3511
        %3544 = vmatprep.subr.bf16.mxu0 %v3510
        %3545 = vmatpush1.bf16.msra.mxu0 %v3509
        %3546 = vmatprep.subr.bf16.mxu0 0
        %3547 = vmatpush2.bf16.msra.mxu0 0
        %3548 = vmatprep.subr.bf16.mxu0 0
        %3549 = vmatpush2.bf16.msra.mxu0 0
        %3550 = vmatprep.subr.bf16.mxu0 0
        %3551 = vmatpush2.bf16.msra.mxu0 0
        %3552 = vmatprep.subr.bf16.mxu0 0
        %3553 = vmatpush2.bf16.msra.mxu0 0
        %3554 = vmatprep.subr.bf16.mxu0 0
        %3555 = vmatpush2.bf16.msra.mxu0 0
        %3556 = vmatprep.subr.bf16.mxu0 0
        %3557 = vmatpush2.bf16.msra.mxu0 0
        %3558 = vmatprep.subr.bf16.mxu0 0
        %3559 = vmatpush2.bf16.msra.mxu0 0
        %3560 = vmatprep.subr.bf16.mxu0 0
        %3561 = vmatpush2.bf16.msra.mxu0 0
        %3562 = vmatprep.mubr.bf16.mxu0 0
        %3563 = vmatmul.mubr.bf16.gmra.mxu0 %v3521
        %v3564 = vpop.f32.mrf.mxu0
        %v3565 = vadd.f32 %v3492, %v3564
        %v3566 = vpop.f32.mrf.mxu0
        %v3567 = vadd.f32 %v3492, %v3566
        %v3568 = vpop.f32.mrf.mxu0
        %v3569 = vpop.f32.mrf.mxu0
        %3570 = vdwg.mxu0
        %v3571 = vmax.f32 %v3565, 0.0
        %v3572 = vmax.f32 %v3567, 0.0
        %3573 = vst [vmem:[%s228] sm:$0xff] %v3571
        %3574 = vst [vmem:[%s228 + $0x8] sm:$0xff] %v3572
        %s3575 = sand.u32 %s120, 1
        %s3576 = scalar_lea.sflag [#allocation6], %s3575
        %s3577 = sand.u32 %s120, 1
        %s3578 = smul.addr %s3577, 16
        %s3579 = scalar_lea.vmem [#allocation7], %s3578
        // Predicated region
        $region41: #{tpu_custom_call.1} parent=31 // pred_check
          %p3580 = pneg %p130
        $region42: #{tpu_custom_call.1} parent=31 // pred_check_branch
          %3582 = sbr.rel (%p3580) target = $region44
        $region43: #{tpu_custom_call.1} parent=31 // pred_region
          %s3584 = ssub.s32 256, 256
          %3585 = vsyncadd %s3576, %s3584
          %s3586 = smul.addr %s25, 2
          %s3587 = smul.addr %s24, 2
          %s3588 = sadd.s32 %s3586, %s3587
          %s3589 = smul.addr %s3588, 128
          %s3590 = scalar_lea.hbm %s3, %s3589
          %s3592 = sshll.u32 %s3579, 4
          %s3593 = int_to_ptr.vmem [resolvable:$true] %s3592
          %3595 = dma.vmem_to_hbm [thread:$0]  %s3593, 256, %s3590, %s3576
        $region44: #{tpu_custom_call.1} parent=31 // pred_fallthru
          _
      $region32: #{tpu_custom_call.1} parent=5 // pred_fallthru
        _
      %p3596 = scmp.le.s32.totalorder 2, %s15
      // Predicated region
      $region45: #{tpu_custom_call.1} parent=5 // pred_check
        %p3597 = pneg %p3596
      $region46: #{tpu_custom_call.1} parent=5 // pred_check_branch
        %3599 = sbr.rel (%p3597) target = $region48
      $region47: #{tpu_custom_call.1} parent=5 // pred_region
        %s3600 = ssub.s32 %s15, 2
        // Predicated region
        $region49: #{tpu_custom_call.1} parent=47 // pred_check
          %p3601 = pneg %p136
        $region50: #{tpu_custom_call.1} parent=47 // pred_check_branch
          %3603 = sbr.rel (%p3601) target = $region52
        $region51: #{tpu_custom_call.1} parent=47 // pred_region
          %s3604 = sand.u32 %s121, 1
          %s3605 = scalar_lea.sflag [#allocation6], %s3604
          %s3606 = sand.u32 %s121, 1
          %s3607 = smul.addr %s3606, 16
          %s3608 = scalar_lea.vmem [#allocation7], %s3607
          %3609 = dma.done %s3605, 256
        $region52: #{tpu_custom_call.1} parent=47 // pred_fallthru
          _
      $region48: #{tpu_custom_call.1} parent=5 // pred_fallthru
        _
    $region6: #{tpu_custom_call.1} parent=1 // loop_footer
      %s19 = sadd.s32 1, %s15
    $region7: #{tpu_custom_call.1} parent=1 // loop_footer_branch
      %14 = sbr.rel target = $region3
    $region8: #{tpu_custom_call.1} parent=1 // loop_exit
      _
    %3610 = vsyncpa [#allocation5], 1
    %s3611 = scalar_lea.sflag [#allocation5], 1
    %3612 = vsyncpa %s3611, 1
    %3613 = vsyncpa [#allocation6], 1
    %s3614 = scalar_lea.sflag [#allocation6], 1
    %3615 = vsyncpa %s3614, 1

</llo_original>
